<compile_context>
chip_gen: v5e
topology: v5e:2x2
jax: 0.10.0
libtpu: 0.0.40
codegen_flags: <defaults>
</compile_context>

<pallas_src>
import jax
import jax.numpy as jnp
from jax import lax
from jax.experimental import pallas as pl
from jax.experimental.pallas import tpu as pltpu


def _round_up(x, m):
    return ((x + m - 1) // m) * m


def _make_block_kernel(H, W, B, Cin_p, Cout, Cout_p, Cmax):
    HW = H * W
    BW = B * HW
    HALO = 128                      # lane-aligned halo; only needs to be >= W + 1

    def kernel(x_ref, w1_ref, b1_ref, w2_ref, b2_ref, masks_ref, sel_ref,
               o_ref, buf_ref):
        # Zero only the two halo strips (aligned, one vreg-row each); the interior is
        # fully overwritten every step.  Per-step on purpose: scratch is per-core.
        strip = jnp.zeros((Cmax, HALO), jnp.float32)
        buf_ref[:, 0:HALO] = strip
        buf_ref[:, HALO + BW:HALO + BW + HALO] = strip

        def conv3x3(Cp, w_ref, b_ref):
            """3x3 conv as 9 shifted-window matmuls accumulated in f32 registers.

            Expects the (Cp, BW) source staged at buf_ref[0:Cp, HALO:HALO+BW].
            Returns ReLU(conv + bias), shape (Cout, BW)."""
            acc = None
            for t in range(9):
                dy, dx = t // 3 - 1, t % 3 - 1
                off = dy * W + dx
                tap = buf_ref[0:Cp, HALO + off:HALO + off + BW]
                if t != 4:
                    # Hoisted 0/1 f32 masks implement the zero padding (and kill the
                    # pixels that a shifted read picks up from a neighboring image row
                    # or image).  All tap values are finite, so multiply == select.
                    tap = tap * masks_ref[t * Cmax:t * Cmax + Cp, :]
                part = jnp.dot(w_ref[:, t * Cp:(t + 1) * Cp], tap,
                               preferred_element_type=jnp.float32)
                acc = part if acc is None else acc + part
            return jnp.maximum(acc + b_ref[...], 0.0)

        # ---- conv1 + ReLU ----
        buf_ref[0:Cin_p, HALO:HALO + BW] = x_ref[...].astype(jnp.float32)
        h = conv3x3(Cin_p, w1_ref, b1_ref)                      # (Cout, BW)

        # ---- conv2 + ReLU ----
        buf_ref[0:Cout, HALO:HALO + BW] = h
        if Cout_p > Cout:   # keep padded channel rows finite (their weights are zero)
            buf_ref[Cout:Cout_p, HALO:HALO + BW] = jnp.zeros((Cout_p - Cout, BW),
                                                             jnp.float32)
        h = conv3x3(Cout_p, w2_ref, b2_ref)                     # (Cout, BW)

        # ---- 2x2 stride-2 max pool on the flattened pixel axis ----
        # Pair-max along x then y; values read across row/image boundaries or from the
        # (zeroed, finite) halo only land on discarded odd-x / odd-y pixels.
        buf_ref[0:Cout, HALO:HALO + BW] = h
        m = jnp.maximum(h, buf_ref[0:Cout, HALO + 1:HALO + 1 + BW])
        buf_ref[0:Cout, HALO:HALO + BW] = m
        m = jnp.maximum(m, buf_ref[0:Cout, HALO + W:HALO + W + BW])

        # Compact the kept (even y, even x) pixels of all B images with one 0/1
        # selection matmul -> lane-dense (Cout, B*Ho*Wo) output tile.
        pooled = jnp.dot(m, sel_ref[...], preferred_element_type=jnp.float32)
        o_ref[...] = pooled.astype(o_ref.dtype)

    return kernel


@jax.jit
def block_forward(x_nchw, w1, b1, w2, b2):
    """Forward pass of Block. x_nchw: (N, Cin, H, W); conv weights in torch OIHW layout."""
    N, Cin, H, W = x_nchw.shape
    Cout = w1.shape[0]
    assert H % 2 == 0 and W % 2 == 0
    Ho, Wo = H // 2, W // 2
    HW, HoWo = H * W, Ho * Wo
    HALO = 128

    # Images per grid step: lane-dense output (B*HoWo multiple of 128), overhead
    # amortization, and >= 2 grid steps whenever N allows (v7x has 2 TensorCores).
    B = max(2, min(4, -(-N // 2)))
    if B % 2:
        B += 1
    Np = _round_up(N, B)
    steps = Np // B
    BW = B * HW

    Cin_p = _round_up(Cin, 8)
    Cout_p = _round_up(Cout, 8)
    Cmax = max(Cin_p, Cout_p)

    # ---- weight-only repack (tiny): OIHW -> (Cout, 9*Cp), K ordered (ky, kx, c) ----
    w1m = jnp.pad(jnp.transpose(w1, (0, 2, 3, 1)),
                  ((0, 0), (0, 0), (0, 0), (0, Cin_p - Cin)))
    w1m = w1m.reshape(Cout, 9 * Cin_p).astype(jnp.float32)
    w2m = jnp.pad(jnp.transpose(w2, (0, 2, 3, 1)),
                  ((0, 0), (0, 0), (0, 0), (0, Cout_p - Cout)))
    w2m = w2m.reshape(Cout, 9 * Cout_p).astype(jnp.float32)
    b1c = b1.reshape(Cout, 1).astype(jnp.float32)
    b2c = b2.reshape(Cout, 1).astype(jnp.float32)

    # ---- activations: B images side-by-side along the lane axis ----
    xp = jnp.pad(x_nchw, ((0, Np - N), (0, Cin_p - Cin), (0, 0), (0, 0)))
    x2d = jnp.transpose(xp, (1, 0, 2, 3)).reshape(Cin_p, Np * HW).astype(jnp.float32)

    # ---- hoisted per-step constants, passed as resident VMEM operands ----
    g = jnp.arange(BW, dtype=jnp.int32)
    p = g % HW
    py, px = p // W, p % W
    mask_rows = []
    for t in range(9):
        dy, dx = t // 3 - 1, t % 3 - 1
        v = ((py + dy >= 0) & (py + dy < H) & (px + dx >= 0) & (px + dx < W))
        mask_rows.append(jnp.broadcast_to(v.astype(jnp.float32)[None, :], (Cmax, BW)))
    masks = jnp.concatenate(mask_rows, axis=0)                 # (9*Cmax, BW)

    j = jnp.arange(B * HoWo, dtype=jnp.int32)
    src = (j // HoWo) * HW + ((j % HoWo) // Wo) * (2 * W) + ((j % HoWo) % Wo) * 2
    sel = (g[:, None] == src[None, :]).astype(jnp.float32)     # (BW, B*HoWo)

    out2d = pl.pallas_call(
        _make_block_kernel(H, W, B, Cin_p, Cout, Cout_p, Cmax),
        out_shape=jax.ShapeDtypeStruct((Cout, Np * HoWo), x_nchw.dtype),
        grid=(steps,),
        in_specs=[
            pl.BlockSpec((Cin_p, BW), lambda n: (0, n)),
            pl.BlockSpec((Cout, 9 * Cin_p), lambda n: (0, 0)),
            pl.BlockSpec((Cout, 1), lambda n: (0, 0)),
            pl.BlockSpec((Cout, 9 * Cout_p), lambda n: (0, 0)),
            pl.BlockSpec((Cout, 1), lambda n: (0, 0)),
            pl.BlockSpec((9 * Cmax, BW), lambda n: (0, 0)),
            pl.BlockSpec((BW, B * HoWo), lambda n: (0, 0)),
        ],
        out_specs=pl.BlockSpec((Cout, B * HoWo), lambda n: (0, n)),
        scratch_shapes=[pltpu.VMEM((Cmax, BW + 2 * HALO), jnp.float32)],
        compiler_params=pltpu.CompilerParams(dimension_semantics=("parallel",)),
    )(x2d, w1m, b1c, w2m, b2c, masks, sel)

    out = out2d.reshape(Cout, Np, Ho, Wo).transpose(1, 0, 2, 3)
    return out[:N]


def _reference_forward(x, w1, b1, w2, b2):
    """Plain-JAX reference (matches the PyTorch module semantics)."""
    dn = lax.conv_dimension_numbers(x.shape, w1.shape, ("NCHW", "OIHW", "NCHW"))
    h = lax.conv_general_dilated(x, w1, (1, 1), ((1, 1), (1, 1)), dimension_numbers=dn)
    h = jnp.maximum(h + b1[None, :, None, None], 0.0)
    h = lax.conv_general_dilated(h, w2, (1, 1), ((1, 1), (1, 1)), dimension_numbers=dn)
    h = jnp.maximum(h + b2[None, :, None, None], 0.0)
    h = lax.reduce_window(h, -jnp.inf, lax.max, (1, 1, 2, 2), (1, 1, 2, 2), "VALID")
    return h


if __name__ == "__main__":
    # batch=2, inchannels=4, outchannels=8, spatial=16x16
    N, Cin, Cout, H, W = 2, 4, 8, 16, 16
    key = jax.random.PRNGKey(0)
    kx, kw1, kb1, kw2, kb2 = jax.random.split(key, 5)

    x = jax.random.normal(kx, (N, Cin, H, W), dtype=jnp.float32)
    # Deterministic "Kaiming-ish" init for the Conv2d weights/biases (torch OIHW layout).
    w1 = jax.random.normal(kw1, (Cout, Cin, 3, 3), dtype=jnp.float32) * (1.0 / (Cin * 9) ** 0.5)
    b1 = jax.random.normal(kb1, (Cout,), dtype=jnp.float32) * 0.1
    w2 = jax.random.normal(kw2, (Cout, Cout, 3, 3), dtype=jnp.float32) * (1.0 / (Cout * 9) ** 0.5)
    b2 = jax.random.normal(kb2, (Cout,), dtype=jnp.float32) * 0.1

    out = jax.block_until_ready(block_forward(x, w1, b1, w2, b2))
    ref = _reference_forward(x, w1, b1, w2, b2)

    assert out.shape == (N, Cout, H // 2, W // 2), out.shape
    assert jnp.allclose(out, ref, atol=1e-4, rtol=1e-4), float(jnp.max(jnp.abs(out - ref)))

    print("KERNEL_OK")
</pallas_src>

<mosaic_0001>
module attributes {stable_mosaic.version = 11 : i64} {
  func.func @kernel(%arg0: i32, %arg1: memref<8x512xf32, #tpu.memory_space<vmem>>, %arg2: memref<8x72xf32, #tpu.memory_space<vmem>>, %arg3: memref<8x1xf32, #tpu.memory_space<vmem>>, %arg4: memref<8x72xf32, #tpu.memory_space<vmem>>, %arg5: memref<8x1xf32, #tpu.memory_space<vmem>>, %arg6: memref<72x512xf32, #tpu.memory_space<vmem>>, %arg7: memref<512x128xf32, #tpu.memory_space<vmem>>, %arg8: memref<8x128xf32, #tpu.memory_space<vmem>>, %arg9: memref<8x768xf32, #tpu.memory_space<vmem>>) attributes {dimension_semantics = [#tpu.dimension_semantics<parallel>], iteration_bounds = array<i64: 1>, scalar_prefetch = 0 : i64, scratch_operands = 1 : i64, tpu.core_type = #tpu.core_type<tc>, window_params = [{transform_indices = @transform_0, window_bounds = array<i64: 8, 512>}, {pipeline_mode = #tpu.pipeline_mode<synchronous>, transform_indices = @transform_1, window_bounds = array<i64: 8, 72>}, {pipeline_mode = #tpu.pipeline_mode<synchronous>, transform_indices = @transform_2, window_bounds = array<i64: 8, 1>}, {pipeline_mode = #tpu.pipeline_mode<synchronous>, transform_indices = @transform_3, window_bounds = array<i64: 8, 72>}, {pipeline_mode = #tpu.pipeline_mode<synchronous>, transform_indices = @transform_4, window_bounds = array<i64: 8, 1>}, {pipeline_mode = #tpu.pipeline_mode<synchronous>, transform_indices = @transform_5, window_bounds = array<i64: 72, 512>}, {pipeline_mode = #tpu.pipeline_mode<synchronous>, transform_indices = @transform_6, window_bounds = array<i64: 512, 128>}, {transform_indices = @transform_7, window_bounds = array<i64: 8, 128>}]} {
    %cst = arith.constant 0.000000e+00 : f32
    %0 = vector.broadcast %cst : f32 to vector<8x128xf32>
    %c0 = arith.constant 0 : index
    %c0_0 = arith.constant 0 : index
    %1 = vector.load %arg9[%c0, %c0_0] : memref<8x768xf32, #tpu.memory_space<vmem>>, vector<8x128xf32>
    tpu.vector_store %arg9[%c0, %c0_0], %0 {strides = array<i32>} : memref<8x768xf32, #tpu.memory_space<vmem>>, vector<8x128xf32>,
    %c0_1 = arith.constant 0 : index
    %c640 = arith.constant 640 : index
    %2 = vector.load %arg9[%c0_1, %c640] : memref<8x768xf32, #tpu.memory_space<vmem>>, vector<8x128xf32>
    tpu.vector_store %arg9[%c0_1, %c640], %0 {strides = array<i32>} : memref<8x768xf32, #tpu.memory_space<vmem>>, vector<8x128xf32>,
    %c0_2 = arith.constant 0 : index
    %c0_3 = arith.constant 0 : index
    %3 = vector.load %arg1[%c0_2, %c0_3] : memref<8x512xf32, #tpu.memory_space<vmem>>, vector<8x512xf32>
    %c0_4 = arith.constant 0 : index
    %c128 = arith.constant 128 : index
    %4 = vector.load %arg9[%c0_4, %c128] : memref<8x768xf32, #tpu.memory_space<vmem>>, vector<8x512xf32>
    tpu.vector_store %arg9[%c0_4, %c128], %3 {strides = array<i32>} : memref<8x768xf32, #tpu.memory_space<vmem>>, vector<8x512xf32>,
    %c0_5 = arith.constant 0 : index
    %c111 = arith.constant 111 : index
    %5 = vector.load %arg9[%c0_5, %c111] : memref<8x768xf32, #tpu.memory_space<vmem>>, vector<8x512xf32>
    %c0_6 = arith.constant 0 : index
    %c0_7 = arith.constant 0 : index
    %6 = vector.load %arg6[%c0_6, %c0_7] : memref<72x512xf32, #tpu.memory_space<vmem>>, vector<8x512xf32>
    %7 = arith.mulf %5, %6 : vector<8x512xf32>
    %c0_8 = arith.constant 0 : index
    %c0_9 = arith.constant 0 : index
    %8 = vector.load %arg2[%c0_8, %c0_9] : memref<8x72xf32, #tpu.memory_space<vmem>>, vector<8x8xf32>
    %cst_10 = arith.constant dense<0.000000e+00> : vector<8x512xf32>
    %9 = tpu.matmul %8, %7, %cst_10 {dimension_numbers = #tpu.dot_dimension_numbers<[1], [0], [0], [1], [0, 0, 1, 1], [], []>} : vector<8x8xf32>, vector<8x512xf32>, vector<8x512xf32> -> vector<8x512xf32>
    %c0_11 = arith.constant 0 : index
    %c112 = arith.constant 112 : index
    %10 = vector.load %arg9[%c0_11, %c112] : memref<8x768xf32, #tpu.memory_space<vmem>>, vector<8x512xf32>
    %c8 = arith.constant 8 : index
    %c0_12 = arith.constant 0 : index
    %11 = vector.load %arg6[%c8, %c0_12] : memref<72x512xf32, #tpu.memory_space<vmem>>, vector<8x512xf32>
    %12 = arith.mulf %10, %11 : vector<8x512xf32>
    %c0_13 = arith.constant 0 : index
    %c8_14 = arith.constant 8 : index
    %13 = vector.load %arg2[%c0_13, %c8_14] : memref<8x72xf32, #tpu.memory_space<vmem>>, vector<8x8xf32>
    %cst_15 = arith.constant dense<0.000000e+00> : vector<8x512xf32>
    %14 = tpu.matmul %13, %12, %cst_15 {dimension_numbers = #tpu.dot_dimension_numbers<[1], [0], [0], [1], [0, 0, 1, 1], [], []>} : vector<8x8xf32>, vector<8x512xf32>, vector<8x512xf32> -> vector<8x512xf32>
    %15 = arith.addf %9, %14 : vector<8x512xf32>
    %c0_16 = arith.constant 0 : index
    %c113 = arith.constant 113 : index
    %16 = vector.load %arg9[%c0_16, %c113] : memref<8x768xf32, #tpu.memory_space<vmem>>, vector<8x512xf32>
    %c16 = arith.constant 16 : index
    %c0_17 = arith.constant 0 : index
    %17 = vector.load %arg6[%c16, %c0_17] : memref<72x512xf32, #tpu.memory_space<vmem>>, vector<8x512xf32>
    %18 = arith.mulf %16, %17 : vector<8x512xf32>
    %c0_18 = arith.constant 0 : index
    %c16_19 = arith.constant 16 : index
    %19 = vector.load %arg2[%c0_18, %c16_19] : memref<8x72xf32, #tpu.memory_space<vmem>>, vector<8x8xf32>
    %cst_20 = arith.constant dense<0.000000e+00> : vector<8x512xf32>
    %20 = tpu.matmul %19, %18, %cst_20 {dimension_numbers = #tpu.dot_dimension_numbers<[1], [0], [0], [1], [0, 0, 1, 1], [], []>} : vector<8x8xf32>, vector<8x512xf32>, vector<8x512xf32> -> vector<8x512xf32>
    %21 = arith.addf %15, %20 : vector<8x512xf32>
    %c0_21 = arith.constant 0 : index
    %c127 = arith.constant 127 : index
    %22 = vector.load %arg9[%c0_21, %c127] : memref<8x768xf32, #tpu.memory_space<vmem>>, vector<8x512xf32>
    %c24 = arith.constant 24 : index
    %c0_22 = arith.constant 0 : index
    %23 = vector.load %arg6[%c24, %c0_22] : memref<72x512xf32, #tpu.memory_space<vmem>>, vector<8x512xf32>
    %24 = arith.mulf %22, %23 : vector<8x512xf32>
    %c0_23 = arith.constant 0 : index
    %c24_24 = arith.constant 24 : index
    %25 = vector.load %arg2[%c0_23, %c24_24] : memref<8x72xf32, #tpu.memory_space<vmem>>, vector<8x8xf32>
    %cst_25 = arith.constant dense<0.000000e+00> : vector<8x512xf32>
    %26 = tpu.matmul %25, %24, %cst_25 {dimension_numbers = #tpu.dot_dimension_numbers<[1], [0], [0], [1], [0, 0, 1, 1], [], []>} : vector<8x8xf32>, vector<8x512xf32>, vector<8x512xf32> -> vector<8x512xf32>
    %27 = arith.addf %21, %26 : vector<8x512xf32>
    %c0_26 = arith.constant 0 : index
    %c128_27 = arith.constant 128 : index
    %28 = vector.load %arg9[%c0_26, %c128_27] : memref<8x768xf32, #tpu.memory_space<vmem>>, vector<8x512xf32>
    %c0_28 = arith.constant 0 : index
    %c32 = arith.constant 32 : index
    %29 = vector.load %arg2[%c0_28, %c32] : memref<8x72xf32, #tpu.memory_space<vmem>>, vector<8x8xf32>
    %cst_29 = arith.constant dense<0.000000e+00> : vector<8x512xf32>
    %30 = tpu.matmul %29, %28, %cst_29 {dimension_numbers = #tpu.dot_dimension_numbers<[1], [0], [0], [1], [0, 0, 1, 1], [], []>} : vector<8x8xf32>, vector<8x512xf32>, vector<8x512xf32> -> vector<8x512xf32>
    %31 = arith.addf %27, %30 : vector<8x512xf32>
    %c0_30 = arith.constant 0 : index
    %c129 = arith.constant 129 : index
    %32 = vector.load %arg9[%c0_30, %c129] : memref<8x768xf32, #tpu.memory_space<vmem>>, vector<8x512xf32>
    %c40 = arith.constant 40 : index
    %c0_31 = arith.constant 0 : index
    %33 = vector.load %arg6[%c40, %c0_31] : memref<72x512xf32, #tpu.memory_space<vmem>>, vector<8x512xf32>
    %34 = arith.mulf %32, %33 : vector<8x512xf32>
    %c0_32 = arith.constant 0 : index
    %c40_33 = arith.constant 40 : index
    %35 = vector.load %arg2[%c0_32, %c40_33] : memref<8x72xf32, #tpu.memory_space<vmem>>, vector<8x8xf32>
    %cst_34 = arith.constant dense<0.000000e+00> : vector<8x512xf32>
    %36 = tpu.matmul %35, %34, %cst_34 {dimension_numbers = #tpu.dot_dimension_numbers<[1], [0], [0], [1], [0, 0, 1, 1], [], []>} : vector<8x8xf32>, vector<8x512xf32>, vector<8x512xf32> -> vector<8x512xf32>
    %37 = arith.addf %31, %36 : vector<8x512xf32>
    %c0_35 = arith.constant 0 : index
    %c143 = arith.constant 143 : index
    %38 = vector.load %arg9[%c0_35, %c143] : memref<8x768xf32, #tpu.memory_space<vmem>>, vector<8x512xf32>
    %c48 = arith.constant 48 : index
    %c0_36 = arith.constant 0 : index
    %39 = vector.load %arg6[%c48, %c0_36] : memref<72x512xf32, #tpu.memory_space<vmem>>, vector<8x512xf32>
    %40 = arith.mulf %38, %39 : vector<8x512xf32>
    %c0_37 = arith.constant 0 : index
    %c48_38 = arith.constant 48 : index
    %41 = vector.load %arg2[%c0_37, %c48_38] : memref<8x72xf32, #tpu.memory_space<vmem>>, vector<8x8xf32>
    %cst_39 = arith.constant dense<0.000000e+00> : vector<8x512xf32>
    %42 = tpu.matmul %41, %40, %cst_39 {dimension_numbers = #tpu.dot_dimension_numbers<[1], [0], [0], [1], [0, 0, 1, 1], [], []>} : vector<8x8xf32>, vector<8x512xf32>, vector<8x512xf32> -> vector<8x512xf32>
    %43 = arith.addf %37, %42 : vector<8x512xf32>
    %c0_40 = arith.constant 0 : index
    %c144 = arith.constant 144 : index
    %44 = vector.load %arg9[%c0_40, %c144] : memref<8x768xf32, #tpu.memory_space<vmem>>, vector<8x512xf32>
    %c56 = arith.constant 56 : index
    %c0_41 = arith.constant 0 : index
    %45 = vector.load %arg6[%c56, %c0_41] : memref<72x512xf32, #tpu.memory_space<vmem>>, vector<8x512xf32>
    %46 = arith.mulf %44, %45 : vector<8x512xf32>
    %c0_42 = arith.constant 0 : index
    %c56_43 = arith.constant 56 : index
    %47 = vector.load %arg2[%c0_42, %c56_43] : memref<8x72xf32, #tpu.memory_space<vmem>>, vector<8x8xf32>
    %cst_44 = arith.constant dense<0.000000e+00> : vector<8x512xf32>
    %48 = tpu.matmul %47, %46, %cst_44 {dimension_numbers = #tpu.dot_dimension_numbers<[1], [0], [0], [1], [0, 0, 1, 1], [], []>} : vector<8x8xf32>, vector<8x512xf32>, vector<8x512xf32> -> vector<8x512xf32>
    %49 = arith.addf %43, %48 : vector<8x512xf32>
    %c0_45 = arith.constant 0 : index
    %c145 = arith.constant 145 : index
    %50 = vector.load %arg9[%c0_45, %c145] : memref<8x768xf32, #tpu.memory_space<vmem>>, vector<8x512xf32>
    %c64 = arith.constant 64 : index
    %c0_46 = arith.constant 0 : index
    %51 = vector.load %arg6[%c64, %c0_46] : memref<72x512xf32, #tpu.memory_space<vmem>>, vector<8x512xf32>
    %52 = arith.mulf %50, %51 : vector<8x512xf32>
    %c0_47 = arith.constant 0 : index
    %c64_48 = arith.constant 64 : index
    %53 = vector.load %arg2[%c0_47, %c64_48] : memref<8x72xf32, #tpu.memory_space<vmem>>, vector<8x8xf32>
    %cst_49 = arith.constant dense<0.000000e+00> : vector<8x512xf32>
    %54 = tpu.matmul %53, %52, %cst_49 {dimension_numbers = #tpu.dot_dimension_numbers<[1], [0], [0], [1], [0, 0, 1, 1], [], []>} : vector<8x8xf32>, vector<8x512xf32>, vector<8x512xf32> -> vector<8x512xf32>
    %55 = arith.addf %49, %54 : vector<8x512xf32>
    %c0_50 = arith.constant 0 : index
    %c0_51 = arith.constant 0 : index
    %56 = vector.load %arg3[%c0_50, %c0_51] : memref<8x1xf32, #tpu.memory_space<vmem>>, vector<8x1xf32>
    %57 = vector.broadcast %56 : vector<8x1xf32> to vector<8x512xf32>
    %58 = arith.addf %55, %57 : vector<8x512xf32>
    %cst_52 = arith.constant 0.000000e+00 : f32
    %59 = vector.broadcast %cst_52 : f32 to vector<8x512xf32>
    %60 = arith.maximumf %58, %59 : vector<8x512xf32>
    %c0_53 = arith.constant 0 : index
    %c128_54 = arith.constant 128 : index
    %61 = vector.load %arg9[%c0_53, %c128_54] : memref<8x768xf32, #tpu.memory_space<vmem>>, vector<8x512xf32>
    tpu.vector_store %arg9[%c0_53, %c128_54], %60 {strides = array<i32>} : memref<8x768xf32, #tpu.memory_space<vmem>>, vector<8x512xf32>,
    %c0_55 = arith.constant 0 : index
    %c111_56 = arith.constant 111 : index
    %62 = vector.load %arg9[%c0_55, %c111_56] : memref<8x768xf32, #tpu.memory_space<vmem>>, vector<8x512xf32>
    %c0_57 = arith.constant 0 : index
    %c0_58 = arith.constant 0 : index
    %63 = vector.load %arg6[%c0_57, %c0_58] : memref<72x512xf32, #tpu.memory_space<vmem>>, vector<8x512xf32>
    %64 = arith.mulf %62, %63 : vector<8x512xf32>
    %c0_59 = arith.constant 0 : index
    %c0_60 = arith.constant 0 : index
    %65 = vector.load %arg4[%c0_59, %c0_60] : memref<8x72xf32, #tpu.memory_space<vmem>>, vector<8x8xf32>
    %cst_61 = arith.constant dense<0.000000e+00> : vector<8x512xf32>
    %66 = tpu.matmul %65, %64, %cst_61 {dimension_numbers = #tpu.dot_dimension_numbers<[1], [0], [0], [1], [0, 0, 1, 1], [], []>} : vector<8x8xf32>, vector<8x512xf32>, vector<8x512xf32> -> vector<8x512xf32>
    %c0_62 = arith.constant 0 : index
    %c112_63 = arith.constant 112 : index
    %67 = vector.load %arg9[%c0_62, %c112_63] : memref<8x768xf32, #tpu.memory_space<vmem>>, vector<8x512xf32>
    %c8_64 = arith.constant 8 : index
    %c0_65 = arith.constant 0 : index
    %68 = vector.load %arg6[%c8_64, %c0_65] : memref<72x512xf32, #tpu.memory_space<vmem>>, vector<8x512xf32>
    %69 = arith.mulf %67, %68 : vector<8x512xf32>
    %c0_66 = arith.constant 0 : index
    %c8_67 = arith.constant 8 : index
    %70 = vector.load %arg4[%c0_66, %c8_67] : memref<8x72xf32, #tpu.memory_space<vmem>>, vector<8x8xf32>
    %cst_68 = arith.constant dense<0.000000e+00> : vector<8x512xf32>
    %71 = tpu.matmul %70, %69, %cst_68 {dimension_numbers = #tpu.dot_dimension_numbers<[1], [0], [0], [1], [0, 0, 1, 1], [], []>} : vector<8x8xf32>, vector<8x512xf32>, vector<8x512xf32> -> vector<8x512xf32>
    %72 = arith.addf %66, %71 : vector<8x512xf32>
    %c0_69 = arith.constant 0 : index
    %c113_70 = arith.constant 113 : index
    %73 = vector.load %arg9[%c0_69, %c113_70] : memref<8x768xf32, #tpu.memory_space<vmem>>, vector<8x512xf32>
    %c16_71 = arith.constant 16 : index
    %c0_72 = arith.constant 0 : index
    %74 = vector.load %arg6[%c16_71, %c0_72] : memref<72x512xf32, #tpu.memory_space<vmem>>, vector<8x512xf32>
    %75 = arith.mulf %73, %74 : vector<8x512xf32>
    %c0_73 = arith.constant 0 : index
    %c16_74 = arith.constant 16 : index
    %76 = vector.load %arg4[%c0_73, %c16_74] : memref<8x72xf32, #tpu.memory_space<vmem>>, vector<8x8xf32>
    %cst_75 = arith.constant dense<0.000000e+00> : vector<8x512xf32>
    %77 = tpu.matmul %76, %75, %cst_75 {dimension_numbers = #tpu.dot_dimension_numbers<[1], [0], [0], [1], [0, 0, 1, 1], [], []>} : vector<8x8xf32>, vector<8x512xf32>, vector<8x512xf32> -> vector<8x512xf32>
    %78 = arith.addf %72, %77 : vector<8x512xf32>
    %c0_76 = arith.constant 0 : index
    %c127_77 = arith.constant 127 : index
    %79 = vector.load %arg9[%c0_76, %c127_77] : memref<8x768xf32, #tpu.memory_space<vmem>>, vector<8x512xf32>
    %c24_78 = arith.constant 24 : index
    %c0_79 = arith.constant 0 : index
    %80 = vector.load %arg6[%c24_78, %c0_79] : memref<72x512xf32, #tpu.memory_space<vmem>>, vector<8x512xf32>
    %81 = arith.mulf %79, %80 : vector<8x512xf32>
    %c0_80 = arith.constant 0 : index
    %c24_81 = arith.constant 24 : index
    %82 = vector.load %arg4[%c0_80, %c24_81] : memref<8x72xf32, #tpu.memory_space<vmem>>, vector<8x8xf32>
    %cst_82 = arith.constant dense<0.000000e+00> : vector<8x512xf32>
    %83 = tpu.matmul %82, %81, %cst_82 {dimension_numbers = #tpu.dot_dimension_numbers<[1], [0], [0], [1], [0, 0, 1, 1], [], []>} : vector<8x8xf32>, vector<8x512xf32>, vector<8x512xf32> -> vector<8x512xf32>
    %84 = arith.addf %78, %83 : vector<8x512xf32>
    %c0_83 = arith.constant 0 : index
    %c128_84 = arith.constant 128 : index
    %85 = vector.load %arg9[%c0_83, %c128_84] : memref<8x768xf32, #tpu.memory_space<vmem>>, vector<8x512xf32>
    %c0_85 = arith.constant 0 : index
    %c32_86 = arith.constant 32 : index
    %86 = vector.load %arg4[%c0_85, %c32_86] : memref<8x72xf32, #tpu.memory_space<vmem>>, vector<8x8xf32>
    %cst_87 = arith.constant dense<0.000000e+00> : vector<8x512xf32>
    %87 = tpu.matmul %86, %85, %cst_87 {dimension_numbers = #tpu.dot_dimension_numbers<[1], [0], [0], [1], [0, 0, 1, 1], [], []>} : vector<8x8xf32>, vector<8x512xf32>, vector<8x512xf32> -> vector<8x512xf32>
    %88 = arith.addf %84, %87 : vector<8x512xf32>
    %c0_88 = arith.constant 0 : index
    %c129_89 = arith.constant 129 : index
    %89 = vector.load %arg9[%c0_88, %c129_89] : memref<8x768xf32, #tpu.memory_space<vmem>>, vector<8x512xf32>
    %c40_90 = arith.constant 40 : index
    %c0_91 = arith.constant 0 : index
    %90 = vector.load %arg6[%c40_90, %c0_91] : memref<72x512xf32, #tpu.memory_space<vmem>>, vector<8x512xf32>
    %91 = arith.mulf %89, %90 : vector<8x512xf32>
    %c0_92 = arith.constant 0 : index
    %c40_93 = arith.constant 40 : index
    %92 = vector.load %arg4[%c0_92, %c40_93] : memref<8x72xf32, #tpu.memory_space<vmem>>, vector<8x8xf32>
    %cst_94 = arith.constant dense<0.000000e+00> : vector<8x512xf32>
    %93 = tpu.matmul %92, %91, %cst_94 {dimension_numbers = #tpu.dot_dimension_numbers<[1], [0], [0], [1], [0, 0, 1, 1], [], []>} : vector<8x8xf32>, vector<8x512xf32>, vector<8x512xf32> -> vector<8x512xf32>
    %94 = arith.addf %88, %93 : vector<8x512xf32>
    %c0_95 = arith.constant 0 : index
    %c143_96 = arith.constant 143 : index
    %95 = vector.load %arg9[%c0_95, %c143_96] : memref<8x768xf32, #tpu.memory_space<vmem>>, vector<8x512xf32>
    %c48_97 = arith.constant 48 : index
    %c0_98 = arith.constant 0 : index
    %96 = vector.load %arg6[%c48_97, %c0_98] : memref<72x512xf32, #tpu.memory_space<vmem>>, vector<8x512xf32>
    %97 = arith.mulf %95, %96 : vector<8x512xf32>
    %c0_99 = arith.constant 0 : index
    %c48_100 = arith.constant 48 : index
    %98 = vector.load %arg4[%c0_99, %c48_100] : memref<8x72xf32, #tpu.memory_space<vmem>>, vector<8x8xf32>
    %cst_101 = arith.constant dense<0.000000e+00> : vector<8x512xf32>
    %99 = tpu.matmul %98, %97, %cst_101 {dimension_numbers = #tpu.dot_dimension_numbers<[1], [0], [0], [1], [0, 0, 1, 1], [], []>} : vector<8x8xf32>, vector<8x512xf32>, vector<8x512xf32> -> vector<8x512xf32>
    %100 = arith.addf %94, %99 : vector<8x512xf32>
    %c0_102 = arith.constant 0 : index
    %c144_103 = arith.constant 144 : index
    %101 = vector.load %arg9[%c0_102, %c144_103] : memref<8x768xf32, #tpu.memory_space<vmem>>, vector<8x512xf32>
    %c56_104 = arith.constant 56 : index
    %c0_105 = arith.constant 0 : index
    %102 = vector.load %arg6[%c56_104, %c0_105] : memref<72x512xf32, #tpu.memory_space<vmem>>, vector<8x512xf32>
    %103 = arith.mulf %101, %102 : vector<8x512xf32>
    %c0_106 = arith.constant 0 : index
    %c56_107 = arith.constant 56 : index
    %104 = vector.load %arg4[%c0_106, %c56_107] : memref<8x72xf32, #tpu.memory_space<vmem>>, vector<8x8xf32>
    %cst_108 = arith.constant dense<0.000000e+00> : vector<8x512xf32>
    %105 = tpu.matmul %104, %103, %cst_108 {dimension_numbers = #tpu.dot_dimension_numbers<[1], [0], [0], [1], [0, 0, 1, 1], [], []>} : vector<8x8xf32>, vector<8x512xf32>, vector<8x512xf32> -> vector<8x512xf32>
    %106 = arith.addf %100, %105 : vector<8x512xf32>
    %c0_109 = arith.constant 0 : index
    %c145_110 = arith.constant 145 : index
    %107 = vector.load %arg9[%c0_109, %c145_110] : memref<8x768xf32, #tpu.memory_space<vmem>>, vector<8x512xf32>
    %c64_111 = arith.constant 64 : index
    %c0_112 = arith.constant 0 : index
    %108 = vector.load %arg6[%c64_111, %c0_112] : memref<72x512xf32, #tpu.memory_space<vmem>>, vector<8x512xf32>
    %109 = arith.mulf %107, %108 : vector<8x512xf32>
    %c0_113 = arith.constant 0 : index
    %c64_114 = arith.constant 64 : index
    %110 = vector.load %arg4[%c0_113, %c64_114] : memref<8x72xf32, #tpu.memory_space<vmem>>, vector<8x8xf32>
    %cst_115 = arith.constant dense<0.000000e+00> : vector<8x512xf32>
    %111 = tpu.matmul %110, %109, %cst_115 {dimension_numbers = #tpu.dot_dimension_numbers<[1], [0], [0], [1], [0, 0, 1, 1], [], []>} : vector<8x8xf32>, vector<8x512xf32>, vector<8x512xf32> -> vector<8x512xf32>
    %112 = arith.addf %106, %111 : vector<8x512xf32>
    %c0_116 = arith.constant 0 : index
    %c0_117 = arith.constant 0 : index
    %113 = vector.load %arg5[%c0_116, %c0_117] : memref<8x1xf32, #tpu.memory_space<vmem>>, vector<8x1xf32>
    %114 = vector.broadcast %113 : vector<8x1xf32> to vector<8x512xf32>
    %115 = arith.addf %112, %114 : vector<8x512xf32>
    %cst_118 = arith.constant 0.000000e+00 : f32
    %116 = vector.broadcast %cst_118 : f32 to vector<8x512xf32>
    %117 = arith.maximumf %115, %116 : vector<8x512xf32>
    %c0_119 = arith.constant 0 : index
    %c128_120 = arith.constant 128 : index
    %118 = vector.load %arg9[%c0_119, %c128_120] : memref<8x768xf32, #tpu.memory_space<vmem>>, vector<8x512xf32>
    tpu.vector_store %arg9[%c0_119, %c128_120], %117 {strides = array<i32>} : memref<8x768xf32, #tpu.memory_space<vmem>>, vector<8x512xf32>,
    %c0_121 = arith.constant 0 : index
    %c129_122 = arith.constant 129 : index
    %119 = vector.load %arg9[%c0_121, %c129_122] : memref<8x768xf32, #tpu.memory_space<vmem>>, vector<8x512xf32>
    %120 = arith.maximumf %117, %119 : vector<8x512xf32>
    %c0_123 = arith.constant 0 : index
    %c128_124 = arith.constant 128 : index
    %121 = vector.load %arg9[%c0_123, %c128_124] : memref<8x768xf32, #tpu.memory_space<vmem>>, vector<8x512xf32>
    tpu.vector_store %arg9[%c0_123, %c128_124], %120 {strides = array<i32>} : memref<8x768xf32, #tpu.memory_space<vmem>>, vector<8x512xf32>,
    %c0_125 = arith.constant 0 : index
    %c144_126 = arith.constant 144 : index
    %122 = vector.load %arg9[%c0_125, %c144_126] : memref<8x768xf32, #tpu.memory_space<vmem>>, vector<8x512xf32>
    %123 = arith.maximumf %120, %122 : vector<8x512xf32>
    %c0_127 = arith.constant 0 : index
    %c0_128 = arith.constant 0 : index
    %124 = vector.load %arg7[%c0_127, %c0_128] : memref<512x128xf32, #tpu.memory_space<vmem>>, vector<512x128xf32>
    %cst_129 = arith.constant dense<0.000000e+00> : vector<8x128xf32>
    %125 = tpu.matmul %123, %124, %cst_129 {dimension_numbers = #tpu.dot_dimension_numbers<[1], [0], [0], [1], [0, 0, 1, 1], [], []>} : vector<8x512xf32>, vector<512x128xf32>, vector<8x128xf32> -> vector<8x128xf32>
    %c0_130 = arith.constant 0 : index
    %c0_131 = arith.constant 0 : index
    %126 = vector.load %arg8[%c0_130, %c0_131] : memref<8x128xf32, #tpu.memory_space<vmem>>, vector<8x128xf32>
    tpu.vector_store %arg8[%c0_130, %c0_131], %125 {strides = array<i32>} : memref<8x128xf32, #tpu.memory_space<vmem>>, vector<8x128xf32>,
    return
  }
  func.func @transform_0(%arg0: i32) -> (i32, i32) {
    %c0_i32 = arith.constant 0 : i32
    %c0_i32_0 = arith.constant 0 : i32
    return %c0_i32, %arg0 : i32, i32
  }
  func.func @transform_1(%arg0: i32) -> (i32, i32) {
    %c0_i32 = arith.constant 0 : i32
    %c0_i32_0 = arith.constant 0 : i32
    %c0_i32_1 = arith.constant 0 : i32
    return %c0_i32, %c0_i32_0 : i32, i32
  }
  func.func @transform_2(%arg0: i32) -> (i32, i32) {
    %c0_i32 = arith.constant 0 : i32
    %c0_i32_0 = arith.constant 0 : i32
    %c0_i32_1 = arith.constant 0 : i32
    return %c0_i32, %c0_i32_0 : i32, i32
  }
  func.func @transform_3(%arg0: i32) -> (i32, i32) {
    %c0_i32 = arith.constant 0 : i32
    %c0_i32_0 = arith.constant 0 : i32
    %c0_i32_1 = arith.constant 0 : i32
    return %c0_i32, %c0_i32_0 : i32, i32
  }
  func.func @transform_4(%arg0: i32) -> (i32, i32) {
    %c0_i32 = arith.constant 0 : i32
    %c0_i32_0 = arith.constant 0 : i32
    %c0_i32_1 = arith.constant 0 : i32
    return %c0_i32, %c0_i32_0 : i32, i32
  }
  func.func @transform_5(%arg0: i32) -> (i32, i32) {
    %c0_i32 = arith.constant 0 : i32
    %c0_i32_0 = arith.constant 0 : i32
    %c0_i32_1 = arith.constant 0 : i32
    return %c0_i32, %c0_i32_0 : i32, i32
  }
  func.func @transform_6(%arg0: i32) -> (i32, i32) {
    %c0_i32 = arith.constant 0 : i32
    %c0_i32_0 = arith.constant 0 : i32
    %c0_i32_1 = arith.constant 0 : i32
    return %c0_i32, %c0_i32_0 : i32, i32
  }
  func.func @transform_7(%arg0: i32) -> (i32, i32) {
    %c0_i32 = arith.constant 0 : i32
    %c0_i32_0 = arith.constant 0 : i32
    return %c0_i32, %arg0 : i32, i32
  }
}

</mosaic_0001>

<llo_original>
// kernel: block_forward.1
$region0: #{block_forward.1}
  #allocation0 [shape = 'u32[]', space=smem, size = 0x4, offset = 0x4, fixed_abs, tag = 'smem constant byte address 0x4 - core index']
  #allocation1 [shape = 'u32[72,128]{1,0:T(1,128)}', space=vmem, size = 0x9000, scoped, tag = 'internal scratch']
  #allocation2 [shape = 'f32[8,768]{1,0:T(8,128)}', space=vmem, size = 0x6000, scoped, tag = 'scratch operand']
  %s0 = inlined_call_operand.vmem [shape: f32[8,512], index: 0, kind: input, shape index: {}]
  %s1 = inlined_call_operand.vmem [shape: f32[8,72], index: 1, kind: input, shape index: {}]
  %s2 = inlined_call_operand.vmem [shape: f32[8,1], index: 2, kind: input, shape index: {}]
  %s3 = inlined_call_operand.vmem [shape: f32[8,72], index: 3, kind: input, shape index: {}]
  %s4 = inlined_call_operand.vmem [shape: f32[8,1], index: 4, kind: input, shape index: {}]
  %s5 = inlined_call_operand.vmem [shape: f32[72,512], index: 5, kind: input, shape index: {}]
  %s6 = inlined_call_operand.vmem [shape: f32[512,128], index: 6, kind: input, shape index: {}]
  %s7 = inlined_call_operand.vmem [shape: f32[8,128], index: 7, kind: output, shape index: {}]
  %s8 = sld [smem:[#allocation0]]
  $region38: #{block_forward.1} parent=0
    _
  %s10 = ssub.s32 1, %s8
  %s11 = scalar_select 0, %s10, %s8
  // Predicated region
  $region2: #{block_forward.1} parent=0 // pred_check
    _
  $region3: #{block_forward.1} parent=0 // pred_check_branch
    %13 = sbr.rel (0) target = $region5
  $region4: #{block_forward.1} parent=0 // pred_region
    _
  $region5: #{block_forward.1} parent=0 // pred_fallthru
    _
  // Predicated region
  $region6: #{block_forward.1} parent=0 // pred_check
    _
  $region7: #{block_forward.1} parent=0 // pred_check_branch
    %15 = sbr.rel (0) target = $region9
  $region8: #{block_forward.1} parent=0 // pred_region
    _
  $region9: #{block_forward.1} parent=0 // pred_fallthru
    _
  // Predicated region
  $region10: #{block_forward.1} parent=0 // pred_check
    _
  $region11: #{block_forward.1} parent=0 // pred_check_branch
    %17 = sbr.rel (0) target = $region13
  $region12: #{block_forward.1} parent=0 // pred_region
    _
  $region13: #{block_forward.1} parent=0 // pred_fallthru
    _
  // Predicated region
  $region14: #{block_forward.1} parent=0 // pred_check
    _
  $region15: #{block_forward.1} parent=0 // pred_check_branch
    %19 = sbr.rel (0) target = $region17
  $region16: #{block_forward.1} parent=0 // pred_region
    _
  $region17: #{block_forward.1} parent=0 // pred_fallthru
    _
  // Predicated region
  $region18: #{block_forward.1} parent=0 // pred_check
    _
  $region19: #{block_forward.1} parent=0 // pred_check_branch
    %21 = sbr.rel (0) target = $region21
  $region20: #{block_forward.1} parent=0 // pred_region
    _
  $region21: #{block_forward.1} parent=0 // pred_fallthru
    _
  // Predicated region
  $region22: #{block_forward.1} parent=0 // pred_check
    _
  $region23: #{block_forward.1} parent=0 // pred_check_branch
    %23 = sbr.rel (0) target = $region25
  $region24: #{block_forward.1} parent=0 // pred_region
    _
  $region25: #{block_forward.1} parent=0 // pred_fallthru
    _
  // Predicated region
  $region26: #{block_forward.1} parent=0 // pred_check
    _
  $region27: #{block_forward.1} parent=0 // pred_check_branch
    %25 = sbr.rel (0) target = $region29
  $region28: #{block_forward.1} parent=0 // pred_region
    _
  $region29: #{block_forward.1} parent=0 // pred_fallthru
    _
  %26 = vst [vmem:[#allocation2] sm:$0xff] 0.0
  %27 = vst [vmem:[#allocation2 + $0x28] sm:$0xff] 0.0
  %v28 = vld [vmem:[%s0] sm:$0xff]
  %v29 = vld [vmem:[%s0 + $0x8] sm:$0xff]
  %v30 = vld [vmem:[%s0 + $0x10] sm:$0xff]
  %v31 = vld [vmem:[%s0 + $0x18] sm:$0xff]
  %32 = vst [vmem:[#allocation2 + $0x8] sm:$0xff] %v28
  %33 = vst [vmem:[#allocation2 + $0x10] sm:$0xff] %v29
  %34 = vst [vmem:[#allocation2 + $0x18] sm:$0xff] %v30
  %35 = vst [vmem:[#allocation2 + $0x20] sm:$0xff] %v31
  %v36 = vld [vmem:[#allocation2] sm:$0xff]
  %v37 = vld [vmem:[#allocation2 + $0x8] sm:$0xff]
  %v38 = vld [vmem:[#allocation2 + $0x10] sm:$0xff]
  %v39 = vld [vmem:[#allocation2 + $0x18] sm:$0xff]
  %v40 = vld [vmem:[#allocation2 + $0x20] sm:$0xff]
  %v41 = vld [vmem:[%s5] sm:$0xff]
  %v42 = vld [vmem:[%s5 + $0x8] sm:$0xff]
  %v43 = vld [vmem:[%s5 + $0x10] sm:$0xff]
  %v44 = vld [vmem:[%s5 + $0x18] sm:$0xff]
  %49 = vrot.lane.b32.xlu0 %v41, 111
  %v50 = vpop.permute.xlu0 %49
  %51 = vrot.lane.b32.xlu0 %v42, 111
  %v52 = vpop.permute.xlu0 %51
  %53 = vrot.lane.b32.xlu0 %v43, 111
  %v54 = vpop.permute.xlu0 %53
  %55 = vrot.lane.b32.xlu0 %v44, 111
  %v56 = vpop.permute.xlu0 %55
  %vm57 = vcmask 908288
  %v58 = vsel %vm57, %v50, %v52
  %v59 = vsel %vm57, %v52, %v54
  %v60 = vsel %vm57, %v54, %v56
  %v66 = vmul.f32 %v36, %v50
  %v67 = vmul.f32 %v37, %v58
  %v68 = vmul.f32 %v38, %v59
  %v69 = vmul.f32 %v39, %v60
  %v70 = vmul.f32 %v40, %v56
  %v71 = vld [vmem:[%s1] sm:$0xff]
  %v72 = vld [vmem:[%s5 + $0x20] sm:$0xff]
  %v73 = vld [vmem:[%s5 + $0x28] sm:$0xff]
  %v74 = vld [vmem:[%s5 + $0x30] sm:$0xff]
  %v75 = vld [vmem:[%s5 + $0x38] sm:$0xff]
  %80 = vrot.lane.b32.xlu0 %v72, 112
  %v81 = vpop.permute.xlu0 %80
  %82 = vrot.lane.b32.xlu0 %v73, 112
  %v83 = vpop.permute.xlu0 %82
  %84 = vrot.lane.b32.xlu0 %v74, 112
  %v85 = vpop.permute.xlu0 %84
  %86 = vrot.lane.b32.xlu0 %v75, 112
  %v87 = vpop.permute.xlu0 %86
  %vm88 = vcmask 916480
  %v89 = vsel %vm88, %v81, %v83
  %v90 = vsel %vm88, %v83, %v85
  %v91 = vsel %vm88, %v85, %v87
  %v97 = vmul.f32 %v36, %v81
  %v98 = vmul.f32 %v37, %v89
  %v99 = vmul.f32 %v38, %v90
  %v100 = vmul.f32 %v39, %v91
  %v101 = vmul.f32 %v40, %v87
  %103 = vrot.lane.b32.xlu0 %v71, 120
  %v104 = vpop.permute.xlu0 %103
  %110 = vrot.lane.b32.xlu0 %v97, 16
  %v111 = vpop.permute.xlu0 %110
  %112 = vrot.lane.b32.xlu0 %v98, 16
  %v113 = vpop.permute.xlu0 %112
  %114 = vrot.lane.b32.xlu0 %v99, 16
  %v115 = vpop.permute.xlu0 %114
  %116 = vrot.lane.b32.xlu0 %v100, 16
  %v117 = vpop.permute.xlu0 %116
  %118 = vrot.lane.b32.xlu0 %v101, 16
  %v119 = vpop.permute.xlu0 %118
  %vm120 = vcmask 130048
  %v121 = vsel %vm120, %v111, %v113
  %v122 = vsel %vm120, %v113, %v115
  %v123 = vsel %vm120, %v115, %v117
  %v124 = vsel %vm120, %v117, %v119
  %vm129 = vcmask 64512
  %v130 = vsel %vm129, %v104, 0
  %132 = vmatpush.msra.mxu0 0.0
  %133 = vmatpush.msra.mxu0 0.0
  %134 = vmatpush.msra.mxu0 0.0
  %135 = vmatpush.msra.mxu0 0.0
  %136 = vmatpush.msra.mxu0 0.0
  %137 = vmatpush.msra.mxu0 0.0
  %138 = vmatpush.msra.mxu0 0.0
  %139 = vmatpush.msra.mxu0 0.0
  %140 = vmatpush.msra.mxu0 0.0
  %141 = vmatpush.msra.mxu0 0.0
  %142 = vmatpush.msra.mxu0 0.0
  %143 = vmatpush.msra.mxu0 0.0
  %144 = vmatpush.msra.mxu0 0.0
  %145 = vmatpush.msra.mxu0 0.0
  %146 = vmatpush.msra.mxu0 0.0
  %147 = vmatpush.msra.mxu0 %v121
  %148 = vmatmul.f32.gmra.mxu0 %v130
  %v149 = vpop.f32.mrf.mxu0
  %v150 = vadd.f32 0.0, %v149
  %151 = vdwg.mxu0
  %152 = vmatpush.msra.mxu0 0.0
  %153 = vmatpush.msra.mxu0 0.0
  %154 = vmatpush.msra.mxu0 0.0
  %155 = vmatpush.msra.mxu0 0.0
  %156 = vmatpush.msra.mxu0 0.0
  %157 = vmatpush.msra.mxu0 0.0
  %158 = vmatpush.msra.mxu0 0.0
  %159 = vmatpush.msra.mxu0 0.0
  %160 = vmatpush.msra.mxu0 0.0
  %161 = vmatpush.msra.mxu0 0.0
  %162 = vmatpush.msra.mxu0 0.0
  %163 = vmatpush.msra.mxu0 0.0
  %164 = vmatpush.msra.mxu0 0.0
  %165 = vmatpush.msra.mxu0 0.0
  %166 = vmatpush.msra.mxu0 0.0
  %167 = vmatpush.msra.mxu0 %v122
  %168 = vmatmul.f32.gmra.mxu0 %v130
  %v169 = vpop.f32.mrf.mxu0
  %v170 = vadd.f32 0.0, %v169
  %171 = vdwg.mxu0
  %172 = vmatpush.msra.mxu0 0.0
  %173 = vmatpush.msra.mxu0 0.0
  %174 = vmatpush.msra.mxu0 0.0
  %175 = vmatpush.msra.mxu0 0.0
  %176 = vmatpush.msra.mxu0 0.0
  %177 = vmatpush.msra.mxu0 0.0
  %178 = vmatpush.msra.mxu0 0.0
  %179 = vmatpush.msra.mxu0 0.0
  %180 = vmatpush.msra.mxu0 0.0
  %181 = vmatpush.msra.mxu0 0.0
  %182 = vmatpush.msra.mxu0 0.0
  %183 = vmatpush.msra.mxu0 0.0
  %184 = vmatpush.msra.mxu0 0.0
  %185 = vmatpush.msra.mxu0 0.0
  %186 = vmatpush.msra.mxu0 0.0
  %187 = vmatpush.msra.mxu0 %v123
  %188 = vmatmul.f32.gmra.mxu0 %v130
  %v189 = vpop.f32.mrf.mxu0
  %v190 = vadd.f32 0.0, %v189
  %191 = vdwg.mxu0
  %192 = vmatpush.msra.mxu0 0.0
  %193 = vmatpush.msra.mxu0 0.0
  %194 = vmatpush.msra.mxu0 0.0
  %195 = vmatpush.msra.mxu0 0.0
  %196 = vmatpush.msra.mxu0 0.0
  %197 = vmatpush.msra.mxu0 0.0
  %198 = vmatpush.msra.mxu0 0.0
  %199 = vmatpush.msra.mxu0 0.0
  %200 = vmatpush.msra.mxu0 0.0
  %201 = vmatpush.msra.mxu0 0.0
  %202 = vmatpush.msra.mxu0 0.0
  %203 = vmatpush.msra.mxu0 0.0
  %204 = vmatpush.msra.mxu0 0.0
  %205 = vmatpush.msra.mxu0 0.0
  %206 = vmatpush.msra.mxu0 0.0
  %207 = vmatpush.msra.mxu0 %v124
  %208 = vmatmul.f32.gmra.mxu0 %v130
  %v209 = vpop.f32.mrf.mxu0
  %v210 = vadd.f32 0.0, %v209
  %211 = vdwg.mxu0
  %217 = vrot.lane.b32.xlu0 %v66, 17
  %v218 = vpop.permute.xlu0 %217
  %219 = vrot.lane.b32.xlu0 %v67, 17
  %v220 = vpop.permute.xlu0 %219
  %221 = vrot.lane.b32.xlu0 %v68, 17
  %v222 = vpop.permute.xlu0 %221
  %223 = vrot.lane.b32.xlu0 %v69, 17
  %v224 = vpop.permute.xlu0 %223
  %225 = vrot.lane.b32.xlu0 %v70, 17
  %v226 = vpop.permute.xlu0 %225
  %vm227 = vcmask 138240
  %v228 = vsel %vm227, %v218, %v220
  %v229 = vsel %vm227, %v220, %v222
  %v230 = vsel %vm227, %v222, %v224
  %v231 = vsel %vm227, %v224, %v226
  %v236 = vsel %vm129, %v71, 0
  %238 = vmatpush.msra.mxu0 0.0
  %239 = vmatpush.msra.mxu0 0.0
  %240 = vmatpush.msra.mxu0 0.0
  %241 = vmatpush.msra.mxu0 0.0
  %242 = vmatpush.msra.mxu0 0.0
  %243 = vmatpush.msra.mxu0 0.0
  %244 = vmatpush.msra.mxu0 0.0
  %245 = vmatpush.msra.mxu0 0.0
  %246 = vmatpush.msra.mxu0 0.0
  %247 = vmatpush.msra.mxu0 0.0
  %248 = vmatpush.msra.mxu0 0.0
  %249 = vmatpush.msra.mxu0 0.0
  %250 = vmatpush.msra.mxu0 0.0
  %251 = vmatpush.msra.mxu0 0.0
  %252 = vmatpush.msra.mxu0 0.0
  %253 = vmatpush.msra.mxu0 %v228
  %254 = vmatmul.f32.gmra.mxu0 %v236
  %v255 = vpop.f32.mrf.mxu0
  %v256 = vadd.f32 %v150, %v255
  %257 = vdwg.mxu0
  %258 = vmatpush.msra.mxu0 0.0
  %259 = vmatpush.msra.mxu0 0.0
  %260 = vmatpush.msra.mxu0 0.0
  %261 = vmatpush.msra.mxu0 0.0
  %262 = vmatpush.msra.mxu0 0.0
  %263 = vmatpush.msra.mxu0 0.0
  %264 = vmatpush.msra.mxu0 0.0
  %265 = vmatpush.msra.mxu0 0.0
  %266 = vmatpush.msra.mxu0 0.0
  %267 = vmatpush.msra.mxu0 0.0
  %268 = vmatpush.msra.mxu0 0.0
  %269 = vmatpush.msra.mxu0 0.0
  %270 = vmatpush.msra.mxu0 0.0
  %271 = vmatpush.msra.mxu0 0.0
  %272 = vmatpush.msra.mxu0 0.0
  %273 = vmatpush.msra.mxu0 %v229
  %274 = vmatmul.f32.gmra.mxu0 %v236
  %v275 = vpop.f32.mrf.mxu0
  %v276 = vadd.f32 %v170, %v275
  %277 = vdwg.mxu0
  %278 = vmatpush.msra.mxu0 0.0
  %279 = vmatpush.msra.mxu0 0.0
  %280 = vmatpush.msra.mxu0 0.0
  %281 = vmatpush.msra.mxu0 0.0
  %282 = vmatpush.msra.mxu0 0.0
  %283 = vmatpush.msra.mxu0 0.0
  %284 = vmatpush.msra.mxu0 0.0
  %285 = vmatpush.msra.mxu0 0.0
  %286 = vmatpush.msra.mxu0 0.0
  %287 = vmatpush.msra.mxu0 0.0
  %288 = vmatpush.msra.mxu0 0.0
  %289 = vmatpush.msra.mxu0 0.0
  %290 = vmatpush.msra.mxu0 0.0
  %291 = vmatpush.msra.mxu0 0.0
  %292 = vmatpush.msra.mxu0 0.0
  %293 = vmatpush.msra.mxu0 %v230
  %294 = vmatmul.f32.gmra.mxu0 %v236
  %v295 = vpop.f32.mrf.mxu0
  %v296 = vadd.f32 %v190, %v295
  %297 = vdwg.mxu0
  %298 = vmatpush.msra.mxu0 0.0
  %299 = vmatpush.msra.mxu0 0.0
  %300 = vmatpush.msra.mxu0 0.0
  %301 = vmatpush.msra.mxu0 0.0
  %302 = vmatpush.msra.mxu0 0.0
  %303 = vmatpush.msra.mxu0 0.0
  %304 = vmatpush.msra.mxu0 0.0
  %305 = vmatpush.msra.mxu0 0.0
  %306 = vmatpush.msra.mxu0 0.0
  %307 = vmatpush.msra.mxu0 0.0
  %308 = vmatpush.msra.mxu0 0.0
  %309 = vmatpush.msra.mxu0 0.0
  %310 = vmatpush.msra.mxu0 0.0
  %311 = vmatpush.msra.mxu0 0.0
  %312 = vmatpush.msra.mxu0 0.0
  %313 = vmatpush.msra.mxu0 %v231
  %314 = vmatmul.f32.gmra.mxu0 %v236
  %v315 = vpop.f32.mrf.mxu0
  %v316 = vadd.f32 %v210, %v315
  %317 = vdwg.mxu0
  %v318 = vld [vmem:[%s5 + $0x40] sm:$0xff]
  %v319 = vld [vmem:[%s5 + $0x48] sm:$0xff]
  %v320 = vld [vmem:[%s5 + $0x50] sm:$0xff]
  %v321 = vld [vmem:[%s5 + $0x58] sm:$0xff]
  %326 = vrot.lane.b32.xlu0 %v318, 113
  %v327 = vpop.permute.xlu0 %326
  %328 = vrot.lane.b32.xlu0 %v319, 113
  %v329 = vpop.permute.xlu0 %328
  %330 = vrot.lane.b32.xlu0 %v320, 113
  %v331 = vpop.permute.xlu0 %330
  %332 = vrot.lane.b32.xlu0 %v321, 113
  %v333 = vpop.permute.xlu0 %332
  %vm334 = vcmask 924672
  %v335 = vsel %vm334, %v327, %v329
  %v336 = vsel %vm334, %v329, %v331
  %v337 = vsel %vm334, %v331, %v333
  %v343 = vmul.f32 %v36, %v327
  %v344 = vmul.f32 %v37, %v335
  %v345 = vmul.f32 %v38, %v336
  %v346 = vmul.f32 %v39, %v337
  %v347 = vmul.f32 %v40, %v333
  %348 = vrot.lane.b32.xlu0 %v71, 112
  %v349 = vpop.permute.xlu0 %348
  %355 = vrot.lane.b32.xlu0 %v343, 15
  %v356 = vpop.permute.xlu0 %355
  %357 = vrot.lane.b32.xlu0 %v344, 15
  %v358 = vpop.permute.xlu0 %357
  %359 = vrot.lane.b32.xlu0 %v345, 15
  %v360 = vpop.permute.xlu0 %359
  %361 = vrot.lane.b32.xlu0 %v346, 15
  %v362 = vpop.permute.xlu0 %361
  %363 = vrot.lane.b32.xlu0 %v347, 15
  %v364 = vpop.permute.xlu0 %363
  %vm365 = vcmask 121856
  %v366 = vsel %vm365, %v356, %v358
  %v367 = vsel %vm365, %v358, %v360
  %v368 = vsel %vm365, %v360, %v362
  %v369 = vsel %vm365, %v362, %v364
  %v374 = vsel %vm129, %v349, 0
  %376 = vmatpush.msra.mxu0 0.0
  %377 = vmatpush.msra.mxu0 0.0
  %378 = vmatpush.msra.mxu0 0.0
  %379 = vmatpush.msra.mxu0 0.0
  %380 = vmatpush.msra.mxu0 0.0
  %381 = vmatpush.msra.mxu0 0.0
  %382 = vmatpush.msra.mxu0 0.0
  %383 = vmatpush.msra.mxu0 0.0
  %384 = vmatpush.msra.mxu0 0.0
  %385 = vmatpush.msra.mxu0 0.0
  %386 = vmatpush.msra.mxu0 0.0
  %387 = vmatpush.msra.mxu0 0.0
  %388 = vmatpush.msra.mxu0 0.0
  %389 = vmatpush.msra.mxu0 0.0
  %390 = vmatpush.msra.mxu0 0.0
  %391 = vmatpush.msra.mxu0 %v366
  %392 = vmatmul.f32.gmra.mxu0 %v374
  %v393 = vpop.f32.mrf.mxu0
  %v394 = vadd.f32 0.0, %v393
  %395 = vdwg.mxu0
  %396 = vmatpush.msra.mxu0 0.0
  %397 = vmatpush.msra.mxu0 0.0
  %398 = vmatpush.msra.mxu0 0.0
  %399 = vmatpush.msra.mxu0 0.0
  %400 = vmatpush.msra.mxu0 0.0
  %401 = vmatpush.msra.mxu0 0.0
  %402 = vmatpush.msra.mxu0 0.0
  %403 = vmatpush.msra.mxu0 0.0
  %404 = vmatpush.msra.mxu0 0.0
  %405 = vmatpush.msra.mxu0 0.0
  %406 = vmatpush.msra.mxu0 0.0
  %407 = vmatpush.msra.mxu0 0.0
  %408 = vmatpush.msra.mxu0 0.0
  %409 = vmatpush.msra.mxu0 0.0
  %410 = vmatpush.msra.mxu0 0.0
  %411 = vmatpush.msra.mxu0 %v367
  %412 = vmatmul.f32.gmra.mxu0 %v374
  %v413 = vpop.f32.mrf.mxu0
  %v414 = vadd.f32 0.0, %v413
  %415 = vdwg.mxu0
  %416 = vmatpush.msra.mxu0 0.0
  %417 = vmatpush.msra.mxu0 0.0
  %418 = vmatpush.msra.mxu0 0.0
  %419 = vmatpush.msra.mxu0 0.0
  %420 = vmatpush.msra.mxu0 0.0
  %421 = vmatpush.msra.mxu0 0.0
  %422 = vmatpush.msra.mxu0 0.0
  %423 = vmatpush.msra.mxu0 0.0
  %424 = vmatpush.msra.mxu0 0.0
  %425 = vmatpush.msra.mxu0 0.0
  %426 = vmatpush.msra.mxu0 0.0
  %427 = vmatpush.msra.mxu0 0.0
  %428 = vmatpush.msra.mxu0 0.0
  %429 = vmatpush.msra.mxu0 0.0
  %430 = vmatpush.msra.mxu0 0.0
  %431 = vmatpush.msra.mxu0 %v368
  %432 = vmatmul.f32.gmra.mxu0 %v374
  %v433 = vpop.f32.mrf.mxu0
  %v434 = vadd.f32 0.0, %v433
  %435 = vdwg.mxu0
  %436 = vmatpush.msra.mxu0 0.0
  %437 = vmatpush.msra.mxu0 0.0
  %438 = vmatpush.msra.mxu0 0.0
  %439 = vmatpush.msra.mxu0 0.0
  %440 = vmatpush.msra.mxu0 0.0
  %441 = vmatpush.msra.mxu0 0.0
  %442 = vmatpush.msra.mxu0 0.0
  %443 = vmatpush.msra.mxu0 0.0
  %444 = vmatpush.msra.mxu0 0.0
  %445 = vmatpush.msra.mxu0 0.0
  %446 = vmatpush.msra.mxu0 0.0
  %447 = vmatpush.msra.mxu0 0.0
  %448 = vmatpush.msra.mxu0 0.0
  %449 = vmatpush.msra.mxu0 0.0
  %450 = vmatpush.msra.mxu0 0.0
  %451 = vmatpush.msra.mxu0 %v369
  %452 = vmatmul.f32.gmra.mxu0 %v374
  %v453 = vpop.f32.mrf.mxu0
  %v454 = vadd.f32 0.0, %v453
  %455 = vdwg.mxu0
  %v456 = vadd.f32 %v256, %v394
  %v457 = vadd.f32 %v276, %v414
  %v458 = vadd.f32 %v296, %v434
  %v459 = vadd.f32 %v316, %v454
  %v460 = vld [vmem:[%s5 + $0x60] sm:$0xff]
  %v461 = vld [vmem:[%s5 + $0x68] sm:$0xff]
  %v462 = vld [vmem:[%s5 + $0x70] sm:$0xff]
  %v463 = vld [vmem:[%s5 + $0x78] sm:$0xff]
  %468 = vrot.lane.b32.xlu0 %v460, 127
  %v469 = vpop.permute.xlu0 %468
  %470 = vrot.lane.b32.xlu0 %v461, 127
  %v471 = vpop.permute.xlu0 %470
  %472 = vrot.lane.b32.xlu0 %v462, 127
  %v473 = vpop.permute.xlu0 %472
  %474 = vrot.lane.b32.xlu0 %v463, 127
  %v475 = vpop.permute.xlu0 %474
  %vm476 = vcmask 1039360
  %v477 = vsel %vm476, %v469, %v471
  %v478 = vsel %vm476, %v471, %v473
  %v479 = vsel %vm476, %v473, %v475
  %v485 = vmul.f32 %v36, %v469
  %v486 = vmul.f32 %v37, %v477
  %v487 = vmul.f32 %v38, %v478
  %v488 = vmul.f32 %v39, %v479
  %v489 = vmul.f32 %v40, %v475
  %490 = vrot.lane.b32.xlu0 %v71, 104
  %v491 = vpop.permute.xlu0 %490
  %497 = vrot.lane.b32.xlu0 %v485, 1
  %v498 = vpop.permute.xlu0 %497
  %499 = vrot.lane.b32.xlu0 %v486, 1
  %v500 = vpop.permute.xlu0 %499
  %501 = vrot.lane.b32.xlu0 %v487, 1
  %v502 = vpop.permute.xlu0 %501
  %503 = vrot.lane.b32.xlu0 %v488, 1
  %v504 = vpop.permute.xlu0 %503
  %505 = vrot.lane.b32.xlu0 %v489, 1
  %v506 = vpop.permute.xlu0 %505
  %vm507 = vcmask 7168
  %v508 = vsel %vm507, %v498, %v500
  %v509 = vsel %vm507, %v500, %v502
  %v510 = vsel %vm507, %v502, %v504
  %v511 = vsel %vm507, %v504, %v506
  %v516 = vsel %vm129, %v491, 0
  %518 = vmatpush.msra.mxu0 0.0
  %519 = vmatpush.msra.mxu0 0.0
  %520 = vmatpush.msra.mxu0 0.0
  %521 = vmatpush.msra.mxu0 0.0
  %522 = vmatpush.msra.mxu0 0.0
  %523 = vmatpush.msra.mxu0 0.0
  %524 = vmatpush.msra.mxu0 0.0
  %525 = vmatpush.msra.mxu0 0.0
  %526 = vmatpush.msra.mxu0 0.0
  %527 = vmatpush.msra.mxu0 0.0
  %528 = vmatpush.msra.mxu0 0.0
  %529 = vmatpush.msra.mxu0 0.0
  %530 = vmatpush.msra.mxu0 0.0
  %531 = vmatpush.msra.mxu0 0.0
  %532 = vmatpush.msra.mxu0 0.0
  %533 = vmatpush.msra.mxu0 %v508
  %534 = vmatmul.f32.gmra.mxu0 %v516
  %v535 = vpop.f32.mrf.mxu0
  %v536 = vadd.f32 0.0, %v535
  %537 = vdwg.mxu0
  %538 = vmatpush.msra.mxu0 0.0
  %539 = vmatpush.msra.mxu0 0.0
  %540 = vmatpush.msra.mxu0 0.0
  %541 = vmatpush.msra.mxu0 0.0
  %542 = vmatpush.msra.mxu0 0.0
  %543 = vmatpush.msra.mxu0 0.0
  %544 = vmatpush.msra.mxu0 0.0
  %545 = vmatpush.msra.mxu0 0.0
  %546 = vmatpush.msra.mxu0 0.0
  %547 = vmatpush.msra.mxu0 0.0
  %548 = vmatpush.msra.mxu0 0.0
  %549 = vmatpush.msra.mxu0 0.0
  %550 = vmatpush.msra.mxu0 0.0
  %551 = vmatpush.msra.mxu0 0.0
  %552 = vmatpush.msra.mxu0 0.0
  %553 = vmatpush.msra.mxu0 %v509
  %554 = vmatmul.f32.gmra.mxu0 %v516
  %v555 = vpop.f32.mrf.mxu0
  %v556 = vadd.f32 0.0, %v555
  %557 = vdwg.mxu0
  %558 = vmatpush.msra.mxu0 0.0
  %559 = vmatpush.msra.mxu0 0.0
  %560 = vmatpush.msra.mxu0 0.0
  %561 = vmatpush.msra.mxu0 0.0
  %562 = vmatpush.msra.mxu0 0.0
  %563 = vmatpush.msra.mxu0 0.0
  %564 = vmatpush.msra.mxu0 0.0
  %565 = vmatpush.msra.mxu0 0.0
  %566 = vmatpush.msra.mxu0 0.0
  %567 = vmatpush.msra.mxu0 0.0
  %568 = vmatpush.msra.mxu0 0.0
  %569 = vmatpush.msra.mxu0 0.0
  %570 = vmatpush.msra.mxu0 0.0
  %571 = vmatpush.msra.mxu0 0.0
  %572 = vmatpush.msra.mxu0 0.0
  %573 = vmatpush.msra.mxu0 %v510
  %574 = vmatmul.f32.gmra.mxu0 %v516
  %v575 = vpop.f32.mrf.mxu0
  %v576 = vadd.f32 0.0, %v575
  %577 = vdwg.mxu0
  %578 = vmatpush.msra.mxu0 0.0
  %579 = vmatpush.msra.mxu0 0.0
  %580 = vmatpush.msra.mxu0 0.0
  %581 = vmatpush.msra.mxu0 0.0
  %582 = vmatpush.msra.mxu0 0.0
  %583 = vmatpush.msra.mxu0 0.0
  %584 = vmatpush.msra.mxu0 0.0
  %585 = vmatpush.msra.mxu0 0.0
  %586 = vmatpush.msra.mxu0 0.0
  %587 = vmatpush.msra.mxu0 0.0
  %588 = vmatpush.msra.mxu0 0.0
  %589 = vmatpush.msra.mxu0 0.0
  %590 = vmatpush.msra.mxu0 0.0
  %591 = vmatpush.msra.mxu0 0.0
  %592 = vmatpush.msra.mxu0 0.0
  %593 = vmatpush.msra.mxu0 %v511
  %594 = vmatmul.f32.gmra.mxu0 %v516
  %v595 = vpop.f32.mrf.mxu0
  %v596 = vadd.f32 0.0, %v595
  %597 = vdwg.mxu0
  %v598 = vadd.f32 %v456, %v536
  %v599 = vadd.f32 %v457, %v556
  %v600 = vadd.f32 %v458, %v576
  %v601 = vadd.f32 %v459, %v596
  %602 = vrot.lane.b32.xlu0 %v71, 96
  %v603 = vpop.permute.xlu0 %602
  %v604 = vsel %vm129, %v603, 0
  %606 = vmatpush.msra.mxu0 0.0
  %607 = vmatpush.msra.mxu0 0.0
  %608 = vmatpush.msra.mxu0 0.0
  %609 = vmatpush.msra.mxu0 0.0
  %610 = vmatpush.msra.mxu0 0.0
  %611 = vmatpush.msra.mxu0 0.0
  %612 = vmatpush.msra.mxu0 0.0
  %613 = vmatpush.msra.mxu0 0.0
  %614 = vmatpush.msra.mxu0 0.0
  %615 = vmatpush.msra.mxu0 0.0
  %616 = vmatpush.msra.mxu0 0.0
  %617 = vmatpush.msra.mxu0 0.0
  %618 = vmatpush.msra.mxu0 0.0
  %619 = vmatpush.msra.mxu0 0.0
  %620 = vmatpush.msra.mxu0 0.0
  %621 = vmatpush.msra.mxu0 %v37
  %622 = vmatmul.f32.gmra.mxu0 %v604
  %v623 = vpop.f32.mrf.mxu0
  %v624 = vadd.f32 0.0, %v623
  %625 = vdwg.mxu0
  %626 = vmatpush.msra.mxu0 0.0
  %627 = vmatpush.msra.mxu0 0.0
  %628 = vmatpush.msra.mxu0 0.0
  %629 = vmatpush.msra.mxu0 0.0
  %630 = vmatpush.msra.mxu0 0.0
  %631 = vmatpush.msra.mxu0 0.0
  %632 = vmatpush.msra.mxu0 0.0
  %633 = vmatpush.msra.mxu0 0.0
  %634 = vmatpush.msra.mxu0 0.0
  %635 = vmatpush.msra.mxu0 0.0
  %636 = vmatpush.msra.mxu0 0.0
  %637 = vmatpush.msra.mxu0 0.0
  %638 = vmatpush.msra.mxu0 0.0
  %639 = vmatpush.msra.mxu0 0.0
  %640 = vmatpush.msra.mxu0 0.0
  %641 = vmatpush.msra.mxu0 %v38
  %642 = vmatmul.f32.gmra.mxu0 %v604
  %v643 = vpop.f32.mrf.mxu0
  %v644 = vadd.f32 0.0, %v643
  %645 = vdwg.mxu0
  %646 = vmatpush.msra.mxu0 0.0
  %647 = vmatpush.msra.mxu0 0.0
  %648 = vmatpush.msra.mxu0 0.0
  %649 = vmatpush.msra.mxu0 0.0
  %650 = vmatpush.msra.mxu0 0.0
  %651 = vmatpush.msra.mxu0 0.0
  %652 = vmatpush.msra.mxu0 0.0
  %653 = vmatpush.msra.mxu0 0.0
  %654 = vmatpush.msra.mxu0 0.0
  %655 = vmatpush.msra.mxu0 0.0
  %656 = vmatpush.msra.mxu0 0.0
  %657 = vmatpush.msra.mxu0 0.0
  %658 = vmatpush.msra.mxu0 0.0
  %659 = vmatpush.msra.mxu0 0.0
  %660 = vmatpush.msra.mxu0 0.0
  %661 = vmatpush.msra.mxu0 %v39
  %662 = vmatmul.f32.gmra.mxu0 %v604
  %v663 = vpop.f32.mrf.mxu0
  %v664 = vadd.f32 0.0, %v663
  %665 = vdwg.mxu0
  %666 = vmatpush.msra.mxu0 0.0
  %667 = vmatpush.msra.mxu0 0.0
  %668 = vmatpush.msra.mxu0 0.0
  %669 = vmatpush.msra.mxu0 0.0
  %670 = vmatpush.msra.mxu0 0.0
  %671 = vmatpush.msra.mxu0 0.0
  %672 = vmatpush.msra.mxu0 0.0
  %673 = vmatpush.msra.mxu0 0.0
  %674 = vmatpush.msra.mxu0 0.0
  %675 = vmatpush.msra.mxu0 0.0
  %676 = vmatpush.msra.mxu0 0.0
  %677 = vmatpush.msra.mxu0 0.0
  %678 = vmatpush.msra.mxu0 0.0
  %679 = vmatpush.msra.mxu0 0.0
  %680 = vmatpush.msra.mxu0 0.0
  %681 = vmatpush.msra.mxu0 %v40
  %682 = vmatmul.f32.gmra.mxu0 %v604
  %v683 = vpop.f32.mrf.mxu0
  %v684 = vadd.f32 0.0, %v683
  %685 = vdwg.mxu0
  %v686 = vadd.f32 %v598, %v624
  %v687 = vadd.f32 %v599, %v644
  %v688 = vadd.f32 %v600, %v664
  %v689 = vadd.f32 %v601, %v684
  %v690 = vld [vmem:[#allocation2 + $0x8] sm:$0xff]
  %v691 = vld [vmem:[#allocation2 + $0x10] sm:$0xff]
  %v692 = vld [vmem:[#allocation2 + $0x18] sm:$0xff]
  %v693 = vld [vmem:[#allocation2 + $0x20] sm:$0xff]
  %v694 = vld [vmem:[#allocation2 + $0x28] sm:$0xff]
  %v695 = vld [vmem:[%s5 + $0xa0] sm:$0xff]
  %v696 = vld [vmem:[%s5 + $0xa8] sm:$0xff]
  %v697 = vld [vmem:[%s5 + $0xb0] sm:$0xff]
  %v698 = vld [vmem:[%s5 + $0xb8] sm:$0xff]
  %703 = vrot.lane.b32.xlu0 %v695, 1
  %v704 = vpop.permute.xlu0 %703
  %705 = vrot.lane.b32.xlu0 %v696, 1
  %v706 = vpop.permute.xlu0 %705
  %707 = vrot.lane.b32.xlu0 %v697, 1
  %v708 = vpop.permute.xlu0 %707
  %709 = vrot.lane.b32.xlu0 %v698, 1
  %v710 = vpop.permute.xlu0 %709
  %v711 = vsel %vm507, %v704, %v706
  %v712 = vsel %vm507, %v706, %v708
  %v713 = vsel %vm507, %v708, %v710
  %v719 = vmul.f32 %v690, %v704
  %v720 = vmul.f32 %v691, %v711
  %v721 = vmul.f32 %v692, %v712
  %v722 = vmul.f32 %v693, %v713
  %v723 = vmul.f32 %v694, %v710
  %724 = vrot.lane.b32.xlu0 %v71, 88
  %v725 = vpop.permute.xlu0 %724
  %731 = vrot.lane.b32.xlu0 %v719, 127
  %v732 = vpop.permute.xlu0 %731
  %733 = vrot.lane.b32.xlu0 %v720, 127
  %v734 = vpop.permute.xlu0 %733
  %735 = vrot.lane.b32.xlu0 %v721, 127
  %v736 = vpop.permute.xlu0 %735
  %737 = vrot.lane.b32.xlu0 %v722, 127
  %v738 = vpop.permute.xlu0 %737
  %739 = vrot.lane.b32.xlu0 %v723, 127
  %v740 = vpop.permute.xlu0 %739
  %v741 = vsel %vm476, %v732, %v734
  %v742 = vsel %vm476, %v734, %v736
  %v743 = vsel %vm476, %v736, %v738
  %v744 = vsel %vm476, %v738, %v740
  %v749 = vsel %vm129, %v725, 0
  %751 = vmatpush.msra.mxu0 0.0
  %752 = vmatpush.msra.mxu0 0.0
  %753 = vmatpush.msra.mxu0 0.0
  %754 = vmatpush.msra.mxu0 0.0
  %755 = vmatpush.msra.mxu0 0.0
  %756 = vmatpush.msra.mxu0 0.0
  %757 = vmatpush.msra.mxu0 0.0
  %758 = vmatpush.msra.mxu0 0.0
  %759 = vmatpush.msra.mxu0 0.0
  %760 = vmatpush.msra.mxu0 0.0
  %761 = vmatpush.msra.mxu0 0.0
  %762 = vmatpush.msra.mxu0 0.0
  %763 = vmatpush.msra.mxu0 0.0
  %764 = vmatpush.msra.mxu0 0.0
  %765 = vmatpush.msra.mxu0 0.0
  %766 = vmatpush.msra.mxu0 %v741
  %767 = vmatmul.f32.gmra.mxu0 %v749
  %v768 = vpop.f32.mrf.mxu0
  %v769 = vadd.f32 0.0, %v768
  %770 = vdwg.mxu0
  %771 = vmatpush.msra.mxu0 0.0
  %772 = vmatpush.msra.mxu0 0.0
  %773 = vmatpush.msra.mxu0 0.0
  %774 = vmatpush.msra.mxu0 0.0
  %775 = vmatpush.msra.mxu0 0.0
  %776 = vmatpush.msra.mxu0 0.0
  %777 = vmatpush.msra.mxu0 0.0
  %778 = vmatpush.msra.mxu0 0.0
  %779 = vmatpush.msra.mxu0 0.0
  %780 = vmatpush.msra.mxu0 0.0
  %781 = vmatpush.msra.mxu0 0.0
  %782 = vmatpush.msra.mxu0 0.0
  %783 = vmatpush.msra.mxu0 0.0
  %784 = vmatpush.msra.mxu0 0.0
  %785 = vmatpush.msra.mxu0 0.0
  %786 = vmatpush.msra.mxu0 %v742
  %787 = vmatmul.f32.gmra.mxu0 %v749
  %v788 = vpop.f32.mrf.mxu0
  %v789 = vadd.f32 0.0, %v788
  %790 = vdwg.mxu0
  %791 = vmatpush.msra.mxu0 0.0
  %792 = vmatpush.msra.mxu0 0.0
  %793 = vmatpush.msra.mxu0 0.0
  %794 = vmatpush.msra.mxu0 0.0
  %795 = vmatpush.msra.mxu0 0.0
  %796 = vmatpush.msra.mxu0 0.0
  %797 = vmatpush.msra.mxu0 0.0
  %798 = vmatpush.msra.mxu0 0.0
  %799 = vmatpush.msra.mxu0 0.0
  %800 = vmatpush.msra.mxu0 0.0
  %801 = vmatpush.msra.mxu0 0.0
  %802 = vmatpush.msra.mxu0 0.0
  %803 = vmatpush.msra.mxu0 0.0
  %804 = vmatpush.msra.mxu0 0.0
  %805 = vmatpush.msra.mxu0 0.0
  %806 = vmatpush.msra.mxu0 %v743
  %807 = vmatmul.f32.gmra.mxu0 %v749
  %v808 = vpop.f32.mrf.mxu0
  %v809 = vadd.f32 0.0, %v808
  %810 = vdwg.mxu0
  %811 = vmatpush.msra.mxu0 0.0
  %812 = vmatpush.msra.mxu0 0.0
  %813 = vmatpush.msra.mxu0 0.0
  %814 = vmatpush.msra.mxu0 0.0
  %815 = vmatpush.msra.mxu0 0.0
  %816 = vmatpush.msra.mxu0 0.0
  %817 = vmatpush.msra.mxu0 0.0
  %818 = vmatpush.msra.mxu0 0.0
  %819 = vmatpush.msra.mxu0 0.0
  %820 = vmatpush.msra.mxu0 0.0
  %821 = vmatpush.msra.mxu0 0.0
  %822 = vmatpush.msra.mxu0 0.0
  %823 = vmatpush.msra.mxu0 0.0
  %824 = vmatpush.msra.mxu0 0.0
  %825 = vmatpush.msra.mxu0 0.0
  %826 = vmatpush.msra.mxu0 %v744
  %827 = vmatmul.f32.gmra.mxu0 %v749
  %v828 = vpop.f32.mrf.mxu0
  %v829 = vadd.f32 0.0, %v828
  %830 = vdwg.mxu0
  %v831 = vadd.f32 %v686, %v769
  %v832 = vadd.f32 %v687, %v789
  %v833 = vadd.f32 %v688, %v809
  %v834 = vadd.f32 %v689, %v829
  %v835 = vld [vmem:[%s5 + $0xc0] sm:$0xff]
  %v836 = vld [vmem:[%s5 + $0xc8] sm:$0xff]
  %v837 = vld [vmem:[%s5 + $0xd0] sm:$0xff]
  %v838 = vld [vmem:[%s5 + $0xd8] sm:$0xff]
  %843 = vrot.lane.b32.xlu0 %v835, 15
  %v844 = vpop.permute.xlu0 %843
  %845 = vrot.lane.b32.xlu0 %v836, 15
  %v846 = vpop.permute.xlu0 %845
  %847 = vrot.lane.b32.xlu0 %v837, 15
  %v848 = vpop.permute.xlu0 %847
  %849 = vrot.lane.b32.xlu0 %v838, 15
  %v850 = vpop.permute.xlu0 %849
  %v851 = vsel %vm365, %v844, %v846
  %v852 = vsel %vm365, %v846, %v848
  %v853 = vsel %vm365, %v848, %v850
  %v859 = vmul.f32 %v690, %v844
  %v860 = vmul.f32 %v691, %v851
  %v861 = vmul.f32 %v692, %v852
  %v862 = vmul.f32 %v693, %v853
  %v863 = vmul.f32 %v694, %v850
  %864 = vrot.lane.b32.xlu0 %v71, 80
  %v865 = vpop.permute.xlu0 %864
  %871 = vrot.lane.b32.xlu0 %v859, 113
  %v872 = vpop.permute.xlu0 %871
  %873 = vrot.lane.b32.xlu0 %v860, 113
  %v874 = vpop.permute.xlu0 %873
  %875 = vrot.lane.b32.xlu0 %v861, 113
  %v876 = vpop.permute.xlu0 %875
  %877 = vrot.lane.b32.xlu0 %v862, 113
  %v878 = vpop.permute.xlu0 %877
  %879 = vrot.lane.b32.xlu0 %v863, 113
  %v880 = vpop.permute.xlu0 %879
  %v881 = vsel %vm334, %v872, %v874
  %v882 = vsel %vm334, %v874, %v876
  %v883 = vsel %vm334, %v876, %v878
  %v884 = vsel %vm334, %v878, %v880
  %v889 = vsel %vm129, %v865, 0
  %891 = vmatpush.msra.mxu0 0.0
  %892 = vmatpush.msra.mxu0 0.0
  %893 = vmatpush.msra.mxu0 0.0
  %894 = vmatpush.msra.mxu0 0.0
  %895 = vmatpush.msra.mxu0 0.0
  %896 = vmatpush.msra.mxu0 0.0
  %897 = vmatpush.msra.mxu0 0.0
  %898 = vmatpush.msra.mxu0 0.0
  %899 = vmatpush.msra.mxu0 0.0
  %900 = vmatpush.msra.mxu0 0.0
  %901 = vmatpush.msra.mxu0 0.0
  %902 = vmatpush.msra.mxu0 0.0
  %903 = vmatpush.msra.mxu0 0.0
  %904 = vmatpush.msra.mxu0 0.0
  %905 = vmatpush.msra.mxu0 0.0
  %906 = vmatpush.msra.mxu0 %v881
  %907 = vmatmul.f32.gmra.mxu0 %v889
  %v908 = vpop.f32.mrf.mxu0
  %v909 = vadd.f32 0.0, %v908
  %910 = vdwg.mxu0
  %911 = vmatpush.msra.mxu0 0.0
  %912 = vmatpush.msra.mxu0 0.0
  %913 = vmatpush.msra.mxu0 0.0
  %914 = vmatpush.msra.mxu0 0.0
  %915 = vmatpush.msra.mxu0 0.0
  %916 = vmatpush.msra.mxu0 0.0
  %917 = vmatpush.msra.mxu0 0.0
  %918 = vmatpush.msra.mxu0 0.0
  %919 = vmatpush.msra.mxu0 0.0
  %920 = vmatpush.msra.mxu0 0.0
  %921 = vmatpush.msra.mxu0 0.0
  %922 = vmatpush.msra.mxu0 0.0
  %923 = vmatpush.msra.mxu0 0.0
  %924 = vmatpush.msra.mxu0 0.0
  %925 = vmatpush.msra.mxu0 0.0
  %926 = vmatpush.msra.mxu0 %v882
  %927 = vmatmul.f32.gmra.mxu0 %v889
  %v928 = vpop.f32.mrf.mxu0
  %v929 = vadd.f32 0.0, %v928
  %930 = vdwg.mxu0
  %931 = vmatpush.msra.mxu0 0.0
  %932 = vmatpush.msra.mxu0 0.0
  %933 = vmatpush.msra.mxu0 0.0
  %934 = vmatpush.msra.mxu0 0.0
  %935 = vmatpush.msra.mxu0 0.0
  %936 = vmatpush.msra.mxu0 0.0
  %937 = vmatpush.msra.mxu0 0.0
  %938 = vmatpush.msra.mxu0 0.0
  %939 = vmatpush.msra.mxu0 0.0
  %940 = vmatpush.msra.mxu0 0.0
  %941 = vmatpush.msra.mxu0 0.0
  %942 = vmatpush.msra.mxu0 0.0
  %943 = vmatpush.msra.mxu0 0.0
  %944 = vmatpush.msra.mxu0 0.0
  %945 = vmatpush.msra.mxu0 0.0
  %946 = vmatpush.msra.mxu0 %v883
  %947 = vmatmul.f32.gmra.mxu0 %v889
  %v948 = vpop.f32.mrf.mxu0
  %v949 = vadd.f32 0.0, %v948
  %950 = vdwg.mxu0
  %951 = vmatpush.msra.mxu0 0.0
  %952 = vmatpush.msra.mxu0 0.0
  %953 = vmatpush.msra.mxu0 0.0
  %954 = vmatpush.msra.mxu0 0.0
  %955 = vmatpush.msra.mxu0 0.0
  %956 = vmatpush.msra.mxu0 0.0
  %957 = vmatpush.msra.mxu0 0.0
  %958 = vmatpush.msra.mxu0 0.0
  %959 = vmatpush.msra.mxu0 0.0
  %960 = vmatpush.msra.mxu0 0.0
  %961 = vmatpush.msra.mxu0 0.0
  %962 = vmatpush.msra.mxu0 0.0
  %963 = vmatpush.msra.mxu0 0.0
  %964 = vmatpush.msra.mxu0 0.0
  %965 = vmatpush.msra.mxu0 0.0
  %966 = vmatpush.msra.mxu0 %v884
  %967 = vmatmul.f32.gmra.mxu0 %v889
  %v968 = vpop.f32.mrf.mxu0
  %v969 = vadd.f32 0.0, %v968
  %970 = vdwg.mxu0
  %v971 = vadd.f32 %v831, %v909
  %v972 = vadd.f32 %v832, %v929
  %v973 = vadd.f32 %v833, %v949
  %v974 = vadd.f32 %v834, %v969
  %v975 = vld [vmem:[%s5 + $0xe0] sm:$0xff]
  %v976 = vld [vmem:[%s5 + $0xe8] sm:$0xff]
  %v977 = vld [vmem:[%s5 + $0xf0] sm:$0xff]
  %v978 = vld [vmem:[%s5 + $0xf8] sm:$0xff]
  %983 = vrot.lane.b32.xlu0 %v975, 16
  %v984 = vpop.permute.xlu0 %983
  %985 = vrot.lane.b32.xlu0 %v976, 16
  %v986 = vpop.permute.xlu0 %985
  %987 = vrot.lane.b32.xlu0 %v977, 16
  %v988 = vpop.permute.xlu0 %987
  %989 = vrot.lane.b32.xlu0 %v978, 16
  %v990 = vpop.permute.xlu0 %989
  %v991 = vsel %vm120, %v984, %v986
  %v992 = vsel %vm120, %v986, %v988
  %v993 = vsel %vm120, %v988, %v990
  %v999 = vmul.f32 %v690, %v984
  %v1000 = vmul.f32 %v691, %v991
  %v1001 = vmul.f32 %v692, %v992
  %v1002 = vmul.f32 %v693, %v993
  %v1003 = vmul.f32 %v694, %v990
  %1004 = vrot.lane.b32.xlu0 %v71, 72
  %v1005 = vpop.permute.xlu0 %1004
  %1011 = vrot.lane.b32.xlu0 %v999, 112
  %v1012 = vpop.permute.xlu0 %1011
  %1013 = vrot.lane.b32.xlu0 %v1000, 112
  %v1014 = vpop.permute.xlu0 %1013
  %1015 = vrot.lane.b32.xlu0 %v1001, 112
  %v1016 = vpop.permute.xlu0 %1015
  %1017 = vrot.lane.b32.xlu0 %v1002, 112
  %v1018 = vpop.permute.xlu0 %1017
  %1019 = vrot.lane.b32.xlu0 %v1003, 112
  %v1020 = vpop.permute.xlu0 %1019
  %v1021 = vsel %vm88, %v1012, %v1014
  %v1022 = vsel %vm88, %v1014, %v1016
  %v1023 = vsel %vm88, %v1016, %v1018
  %v1024 = vsel %vm88, %v1018, %v1020
  %v1029 = vsel %vm129, %v1005, 0
  %1031 = vmatpush.msra.mxu0 0.0
  %1032 = vmatpush.msra.mxu0 0.0
  %1033 = vmatpush.msra.mxu0 0.0
  %1034 = vmatpush.msra.mxu0 0.0
  %1035 = vmatpush.msra.mxu0 0.0
  %1036 = vmatpush.msra.mxu0 0.0
  %1037 = vmatpush.msra.mxu0 0.0
  %1038 = vmatpush.msra.mxu0 0.0
  %1039 = vmatpush.msra.mxu0 0.0
  %1040 = vmatpush.msra.mxu0 0.0
  %1041 = vmatpush.msra.mxu0 0.0
  %1042 = vmatpush.msra.mxu0 0.0
  %1043 = vmatpush.msra.mxu0 0.0
  %1044 = vmatpush.msra.mxu0 0.0
  %1045 = vmatpush.msra.mxu0 0.0
  %1046 = vmatpush.msra.mxu0 %v1021
  %1047 = vmatmul.f32.gmra.mxu0 %v1029
  %v1048 = vpop.f32.mrf.mxu0
  %v1049 = vadd.f32 0.0, %v1048
  %1050 = vdwg.mxu0
  %1051 = vmatpush.msra.mxu0 0.0
  %1052 = vmatpush.msra.mxu0 0.0
  %1053 = vmatpush.msra.mxu0 0.0
  %1054 = vmatpush.msra.mxu0 0.0
  %1055 = vmatpush.msra.mxu0 0.0
  %1056 = vmatpush.msra.mxu0 0.0
  %1057 = vmatpush.msra.mxu0 0.0
  %1058 = vmatpush.msra.mxu0 0.0
  %1059 = vmatpush.msra.mxu0 0.0
  %1060 = vmatpush.msra.mxu0 0.0
  %1061 = vmatpush.msra.mxu0 0.0
  %1062 = vmatpush.msra.mxu0 0.0
  %1063 = vmatpush.msra.mxu0 0.0
  %1064 = vmatpush.msra.mxu0 0.0
  %1065 = vmatpush.msra.mxu0 0.0
  %1066 = vmatpush.msra.mxu0 %v1022
  %1067 = vmatmul.f32.gmra.mxu0 %v1029
  %v1068 = vpop.f32.mrf.mxu0
  %v1069 = vadd.f32 0.0, %v1068
  %1070 = vdwg.mxu0
  %1071 = vmatpush.msra.mxu0 0.0
  %1072 = vmatpush.msra.mxu0 0.0
  %1073 = vmatpush.msra.mxu0 0.0
  %1074 = vmatpush.msra.mxu0 0.0
  %1075 = vmatpush.msra.mxu0 0.0
  %1076 = vmatpush.msra.mxu0 0.0
  %1077 = vmatpush.msra.mxu0 0.0
  %1078 = vmatpush.msra.mxu0 0.0
  %1079 = vmatpush.msra.mxu0 0.0
  %1080 = vmatpush.msra.mxu0 0.0
  %1081 = vmatpush.msra.mxu0 0.0
  %1082 = vmatpush.msra.mxu0 0.0
  %1083 = vmatpush.msra.mxu0 0.0
  %1084 = vmatpush.msra.mxu0 0.0
  %1085 = vmatpush.msra.mxu0 0.0
  %1086 = vmatpush.msra.mxu0 %v1023
  %1087 = vmatmul.f32.gmra.mxu0 %v1029
  %v1088 = vpop.f32.mrf.mxu0
  %v1089 = vadd.f32 0.0, %v1088
  %1090 = vdwg.mxu0
  %1091 = vmatpush.msra.mxu0 0.0
  %1092 = vmatpush.msra.mxu0 0.0
  %1093 = vmatpush.msra.mxu0 0.0
  %1094 = vmatpush.msra.mxu0 0.0
  %1095 = vmatpush.msra.mxu0 0.0
  %1096 = vmatpush.msra.mxu0 0.0
  %1097 = vmatpush.msra.mxu0 0.0
  %1098 = vmatpush.msra.mxu0 0.0
  %1099 = vmatpush.msra.mxu0 0.0
  %1100 = vmatpush.msra.mxu0 0.0
  %1101 = vmatpush.msra.mxu0 0.0
  %1102 = vmatpush.msra.mxu0 0.0
  %1103 = vmatpush.msra.mxu0 0.0
  %1104 = vmatpush.msra.mxu0 0.0
  %1105 = vmatpush.msra.mxu0 0.0
  %1106 = vmatpush.msra.mxu0 %v1024
  %1107 = vmatmul.f32.gmra.mxu0 %v1029
  %v1108 = vpop.f32.mrf.mxu0
  %v1109 = vadd.f32 0.0, %v1108
  %1110 = vdwg.mxu0
  %v1111 = vadd.f32 %v971, %v1049
  %v1112 = vadd.f32 %v972, %v1069
  %v1113 = vadd.f32 %v973, %v1089
  %v1114 = vadd.f32 %v974, %v1109
  %v1115 = vld [vmem:[%s5 + $0x100] sm:$0xff]
  %v1116 = vld [vmem:[%s5 + $0x108] sm:$0xff]
  %v1117 = vld [vmem:[%s5 + $0x110] sm:$0xff]
  %v1118 = vld [vmem:[%s5 + $0x118] sm:$0xff]
  %1123 = vrot.lane.b32.xlu0 %v1115, 17
  %v1124 = vpop.permute.xlu0 %1123
  %1125 = vrot.lane.b32.xlu0 %v1116, 17
  %v1126 = vpop.permute.xlu0 %1125
  %1127 = vrot.lane.b32.xlu0 %v1117, 17
  %v1128 = vpop.permute.xlu0 %1127
  %1129 = vrot.lane.b32.xlu0 %v1118, 17
  %v1130 = vpop.permute.xlu0 %1129
  %v1131 = vsel %vm227, %v1124, %v1126
  %v1132 = vsel %vm227, %v1126, %v1128
  %v1133 = vsel %vm227, %v1128, %v1130
  %v1139 = vmul.f32 %v690, %v1124
  %v1140 = vmul.f32 %v691, %v1131
  %v1141 = vmul.f32 %v692, %v1132
  %v1142 = vmul.f32 %v693, %v1133
  %v1143 = vmul.f32 %v694, %v1130
  %1144 = vrot.lane.b32.xlu0 %v71, 64
  %v1145 = vpop.permute.xlu0 %1144
  %1151 = vrot.lane.b32.xlu0 %v1139, 111
  %v1152 = vpop.permute.xlu0 %1151
  %1153 = vrot.lane.b32.xlu0 %v1140, 111
  %v1154 = vpop.permute.xlu0 %1153
  %1155 = vrot.lane.b32.xlu0 %v1141, 111
  %v1156 = vpop.permute.xlu0 %1155
  %1157 = vrot.lane.b32.xlu0 %v1142, 111
  %v1158 = vpop.permute.xlu0 %1157
  %1159 = vrot.lane.b32.xlu0 %v1143, 111
  %v1160 = vpop.permute.xlu0 %1159
  %v1161 = vsel %vm57, %v1152, %v1154
  %v1162 = vsel %vm57, %v1154, %v1156
  %v1163 = vsel %vm57, %v1156, %v1158
  %v1164 = vsel %vm57, %v1158, %v1160
  %v1169 = vsel %vm129, %v1145, 0
  %1171 = vmatpush.msra.mxu0 0.0
  %1172 = vmatpush.msra.mxu0 0.0
  %1173 = vmatpush.msra.mxu0 0.0
  %1174 = vmatpush.msra.mxu0 0.0
  %1175 = vmatpush.msra.mxu0 0.0
  %1176 = vmatpush.msra.mxu0 0.0
  %1177 = vmatpush.msra.mxu0 0.0
  %1178 = vmatpush.msra.mxu0 0.0
  %1179 = vmatpush.msra.mxu0 0.0
  %1180 = vmatpush.msra.mxu0 0.0
  %1181 = vmatpush.msra.mxu0 0.0
  %1182 = vmatpush.msra.mxu0 0.0
  %1183 = vmatpush.msra.mxu0 0.0
  %1184 = vmatpush.msra.mxu0 0.0
  %1185 = vmatpush.msra.mxu0 0.0
  %1186 = vmatpush.msra.mxu0 %v1161
  %1187 = vmatmul.f32.gmra.mxu0 %v1169
  %v1188 = vpop.f32.mrf.mxu0
  %v1189 = vadd.f32 0.0, %v1188
  %1190 = vdwg.mxu0
  %1191 = vmatpush.msra.mxu0 0.0
  %1192 = vmatpush.msra.mxu0 0.0
  %1193 = vmatpush.msra.mxu0 0.0
  %1194 = vmatpush.msra.mxu0 0.0
  %1195 = vmatpush.msra.mxu0 0.0
  %1196 = vmatpush.msra.mxu0 0.0
  %1197 = vmatpush.msra.mxu0 0.0
  %1198 = vmatpush.msra.mxu0 0.0
  %1199 = vmatpush.msra.mxu0 0.0
  %1200 = vmatpush.msra.mxu0 0.0
  %1201 = vmatpush.msra.mxu0 0.0
  %1202 = vmatpush.msra.mxu0 0.0
  %1203 = vmatpush.msra.mxu0 0.0
  %1204 = vmatpush.msra.mxu0 0.0
  %1205 = vmatpush.msra.mxu0 0.0
  %1206 = vmatpush.msra.mxu0 %v1162
  %1207 = vmatmul.f32.gmra.mxu0 %v1169
  %v1208 = vpop.f32.mrf.mxu0
  %v1209 = vadd.f32 0.0, %v1208
  %1210 = vdwg.mxu0
  %1211 = vmatpush.msra.mxu0 0.0
  %1212 = vmatpush.msra.mxu0 0.0
  %1213 = vmatpush.msra.mxu0 0.0
  %1214 = vmatpush.msra.mxu0 0.0
  %1215 = vmatpush.msra.mxu0 0.0
  %1216 = vmatpush.msra.mxu0 0.0
  %1217 = vmatpush.msra.mxu0 0.0
  %1218 = vmatpush.msra.mxu0 0.0
  %1219 = vmatpush.msra.mxu0 0.0
  %1220 = vmatpush.msra.mxu0 0.0
  %1221 = vmatpush.msra.mxu0 0.0
  %1222 = vmatpush.msra.mxu0 0.0
  %1223 = vmatpush.msra.mxu0 0.0
  %1224 = vmatpush.msra.mxu0 0.0
  %1225 = vmatpush.msra.mxu0 0.0
  %1226 = vmatpush.msra.mxu0 %v1163
  %1227 = vmatmul.f32.gmra.mxu0 %v1169
  %v1228 = vpop.f32.mrf.mxu0
  %v1229 = vadd.f32 0.0, %v1228
  %1230 = vdwg.mxu0
  %1231 = vmatpush.msra.mxu0 0.0
  %1232 = vmatpush.msra.mxu0 0.0
  %1233 = vmatpush.msra.mxu0 0.0
  %1234 = vmatpush.msra.mxu0 0.0
  %1235 = vmatpush.msra.mxu0 0.0
  %1236 = vmatpush.msra.mxu0 0.0
  %1237 = vmatpush.msra.mxu0 0.0
  %1238 = vmatpush.msra.mxu0 0.0
  %1239 = vmatpush.msra.mxu0 0.0
  %1240 = vmatpush.msra.mxu0 0.0
  %1241 = vmatpush.msra.mxu0 0.0
  %1242 = vmatpush.msra.mxu0 0.0
  %1243 = vmatpush.msra.mxu0 0.0
  %1244 = vmatpush.msra.mxu0 0.0
  %1245 = vmatpush.msra.mxu0 0.0
  %1246 = vmatpush.msra.mxu0 %v1164
  %1247 = vmatmul.f32.gmra.mxu0 %v1169
  %v1248 = vpop.f32.mrf.mxu0
  %v1249 = vadd.f32 0.0, %v1248
  %1250 = vdwg.mxu0
  %v1251 = vadd.f32 %v1111, %v1189
  %v1252 = vadd.f32 %v1112, %v1209
  %v1253 = vadd.f32 %v1113, %v1229
  %v1254 = vadd.f32 %v1114, %v1249
  %v1255 = vld [vmem:[%s2] sm:$0xff]
  %1257 = vset.pattern.permute.xlu0 0
  %1258 = vperm.xlu0 %1257, %v1255
  %v1259 = vpop.permute.xlu0 %1258
  %v1261 = vadd.f32 %v1251, %v1259
  %v1262 = vadd.f32 %v1252, %v1259
  %v1263 = vadd.f32 %v1253, %v1259
  %v1264 = vadd.f32 %v1254, %v1259
  %v1265 = vmax.f32 %v1261, 0.0
  %v1266 = vmax.f32 %v1262, 0.0
  %v1267 = vmax.f32 %v1263, 0.0
  %v1268 = vmax.f32 %v1264, 0.0
  %1269 = vst [vmem:[#allocation2 + $0x8] sm:$0xff] %v1265
  %1270 = vst [vmem:[#allocation2 + $0x10] sm:$0xff] %v1266
  %1271 = vst [vmem:[#allocation2 + $0x18] sm:$0xff] %v1267
  %1272 = vst [vmem:[#allocation2 + $0x20] sm:$0xff] %v1268
  %v1273 = vld [vmem:[#allocation2] sm:$0xff]
  %v1274 = vld [vmem:[#allocation2 + $0x8] sm:$0xff]
  %v1275 = vld [vmem:[#allocation2 + $0x10] sm:$0xff]
  %v1276 = vld [vmem:[#allocation2 + $0x18] sm:$0xff]
  %v1277 = vld [vmem:[#allocation2 + $0x20] sm:$0xff]
  %v1278 = vld [vmem:[%s5] sm:$0xff]
  %v1279 = vld [vmem:[%s5 + $0x8] sm:$0xff]
  %v1280 = vld [vmem:[%s5 + $0x10] sm:$0xff]
  %v1281 = vld [vmem:[%s5 + $0x18] sm:$0xff]
  %1286 = vrot.lane.b32.xlu0 %v1278, 111
  %v1287 = vpop.permute.xlu0 %1286
  %1288 = vrot.lane.b32.xlu0 %v1279, 111
  %v1289 = vpop.permute.xlu0 %1288
  %1290 = vrot.lane.b32.xlu0 %v1280, 111
  %v1291 = vpop.permute.xlu0 %1290
  %1292 = vrot.lane.b32.xlu0 %v1281, 111
  %v1293 = vpop.permute.xlu0 %1292
  %v1294 = vsel %vm57, %v1287, %v1289
  %v1295 = vsel %vm57, %v1289, %v1291
  %v1296 = vsel %vm57, %v1291, %v1293
  %v1302 = vmul.f32 %v1273, %v1287
  %v1303 = vmul.f32 %v1274, %v1294
  %v1304 = vmul.f32 %v1275, %v1295
  %v1305 = vmul.f32 %v1276, %v1296
  %v1306 = vmul.f32 %v1277, %v1293
  %v1307 = vld [vmem:[%s3] sm:$0xff]
  %v1308 = vld [vmem:[%s5 + $0x20] sm:$0xff]
  %v1309 = vld [vmem:[%s5 + $0x28] sm:$0xff]
  %v1310 = vld [vmem:[%s5 + $0x30] sm:$0xff]
  %v1311 = vld [vmem:[%s5 + $0x38] sm:$0xff]
  %1316 = vrot.lane.b32.xlu0 %v1308, 112
  %v1317 = vpop.permute.xlu0 %1316
  %1318 = vrot.lane.b32.xlu0 %v1309, 112
  %v1319 = vpop.permute.xlu0 %1318
  %1320 = vrot.lane.b32.xlu0 %v1310, 112
  %v1321 = vpop.permute.xlu0 %1320
  %1322 = vrot.lane.b32.xlu0 %v1311, 112
  %v1323 = vpop.permute.xlu0 %1322
  %v1324 = vsel %vm88, %v1317, %v1319
  %v1325 = vsel %vm88, %v1319, %v1321
  %v1326 = vsel %vm88, %v1321, %v1323
  %v1332 = vmul.f32 %v1273, %v1317
  %v1333 = vmul.f32 %v1274, %v1324
  %v1334 = vmul.f32 %v1275, %v1325
  %v1335 = vmul.f32 %v1276, %v1326
  %v1336 = vmul.f32 %v1277, %v1323
  %1338 = vrot.lane.b32.xlu0 %v1307, 120
  %v1339 = vpop.permute.xlu0 %1338
  %1345 = vrot.lane.b32.xlu0 %v1332, 16
  %v1346 = vpop.permute.xlu0 %1345
  %1347 = vrot.lane.b32.xlu0 %v1333, 16
  %v1348 = vpop.permute.xlu0 %1347
  %1349 = vrot.lane.b32.xlu0 %v1334, 16
  %v1350 = vpop.permute.xlu0 %1349
  %1351 = vrot.lane.b32.xlu0 %v1335, 16
  %v1352 = vpop.permute.xlu0 %1351
  %1353 = vrot.lane.b32.xlu0 %v1336, 16
  %v1354 = vpop.permute.xlu0 %1353
  %v1355 = vsel %vm120, %v1346, %v1348
  %v1356 = vsel %vm120, %v1348, %v1350
  %v1357 = vsel %vm120, %v1350, %v1352
  %v1358 = vsel %vm120, %v1352, %v1354
  %v1363 = vsel %vm129, %v1339, 0
  %1365 = vmatpush.msra.mxu0 0.0
  %1366 = vmatpush.msra.mxu0 0.0
  %1367 = vmatpush.msra.mxu0 0.0
  %1368 = vmatpush.msra.mxu0 0.0
  %1369 = vmatpush.msra.mxu0 0.0
  %1370 = vmatpush.msra.mxu0 0.0
  %1371 = vmatpush.msra.mxu0 0.0
  %1372 = vmatpush.msra.mxu0 0.0
  %1373 = vmatpush.msra.mxu0 0.0
  %1374 = vmatpush.msra.mxu0 0.0
  %1375 = vmatpush.msra.mxu0 0.0
  %1376 = vmatpush.msra.mxu0 0.0
  %1377 = vmatpush.msra.mxu0 0.0
  %1378 = vmatpush.msra.mxu0 0.0
  %1379 = vmatpush.msra.mxu0 0.0
  %1380 = vmatpush.msra.mxu0 %v1355
  %1381 = vmatmul.f32.gmra.mxu0 %v1363
  %v1382 = vpop.f32.mrf.mxu0
  %v1383 = vadd.f32 0.0, %v1382
  %1384 = vdwg.mxu0
  %1385 = vmatpush.msra.mxu0 0.0
  %1386 = vmatpush.msra.mxu0 0.0
  %1387 = vmatpush.msra.mxu0 0.0
  %1388 = vmatpush.msra.mxu0 0.0
  %1389 = vmatpush.msra.mxu0 0.0
  %1390 = vmatpush.msra.mxu0 0.0
  %1391 = vmatpush.msra.mxu0 0.0
  %1392 = vmatpush.msra.mxu0 0.0
  %1393 = vmatpush.msra.mxu0 0.0
  %1394 = vmatpush.msra.mxu0 0.0
  %1395 = vmatpush.msra.mxu0 0.0
  %1396 = vmatpush.msra.mxu0 0.0
  %1397 = vmatpush.msra.mxu0 0.0
  %1398 = vmatpush.msra.mxu0 0.0
  %1399 = vmatpush.msra.mxu0 0.0
  %1400 = vmatpush.msra.mxu0 %v1356
  %1401 = vmatmul.f32.gmra.mxu0 %v1363
  %v1402 = vpop.f32.mrf.mxu0
  %v1403 = vadd.f32 0.0, %v1402
  %1404 = vdwg.mxu0
  %1405 = vmatpush.msra.mxu0 0.0
  %1406 = vmatpush.msra.mxu0 0.0
  %1407 = vmatpush.msra.mxu0 0.0
  %1408 = vmatpush.msra.mxu0 0.0
  %1409 = vmatpush.msra.mxu0 0.0
  %1410 = vmatpush.msra.mxu0 0.0
  %1411 = vmatpush.msra.mxu0 0.0
  %1412 = vmatpush.msra.mxu0 0.0
  %1413 = vmatpush.msra.mxu0 0.0
  %1414 = vmatpush.msra.mxu0 0.0
  %1415 = vmatpush.msra.mxu0 0.0
  %1416 = vmatpush.msra.mxu0 0.0
  %1417 = vmatpush.msra.mxu0 0.0
  %1418 = vmatpush.msra.mxu0 0.0
  %1419 = vmatpush.msra.mxu0 0.0
  %1420 = vmatpush.msra.mxu0 %v1357
  %1421 = vmatmul.f32.gmra.mxu0 %v1363
  %v1422 = vpop.f32.mrf.mxu0
  %v1423 = vadd.f32 0.0, %v1422
  %1424 = vdwg.mxu0
  %1425 = vmatpush.msra.mxu0 0.0
  %1426 = vmatpush.msra.mxu0 0.0
  %1427 = vmatpush.msra.mxu0 0.0
  %1428 = vmatpush.msra.mxu0 0.0
  %1429 = vmatpush.msra.mxu0 0.0
  %1430 = vmatpush.msra.mxu0 0.0
  %1431 = vmatpush.msra.mxu0 0.0
  %1432 = vmatpush.msra.mxu0 0.0
  %1433 = vmatpush.msra.mxu0 0.0
  %1434 = vmatpush.msra.mxu0 0.0
  %1435 = vmatpush.msra.mxu0 0.0
  %1436 = vmatpush.msra.mxu0 0.0
  %1437 = vmatpush.msra.mxu0 0.0
  %1438 = vmatpush.msra.mxu0 0.0
  %1439 = vmatpush.msra.mxu0 0.0
  %1440 = vmatpush.msra.mxu0 %v1358
  %1441 = vmatmul.f32.gmra.mxu0 %v1363
  %v1442 = vpop.f32.mrf.mxu0
  %v1443 = vadd.f32 0.0, %v1442
  %1444 = vdwg.mxu0
  %1450 = vrot.lane.b32.xlu0 %v1302, 17
  %v1451 = vpop.permute.xlu0 %1450
  %1452 = vrot.lane.b32.xlu0 %v1303, 17
  %v1453 = vpop.permute.xlu0 %1452
  %1454 = vrot.lane.b32.xlu0 %v1304, 17
  %v1455 = vpop.permute.xlu0 %1454
  %1456 = vrot.lane.b32.xlu0 %v1305, 17
  %v1457 = vpop.permute.xlu0 %1456
  %1458 = vrot.lane.b32.xlu0 %v1306, 17
  %v1459 = vpop.permute.xlu0 %1458
  %v1460 = vsel %vm227, %v1451, %v1453
  %v1461 = vsel %vm227, %v1453, %v1455
  %v1462 = vsel %vm227, %v1455, %v1457
  %v1463 = vsel %vm227, %v1457, %v1459
  %v1468 = vsel %vm129, %v1307, 0
  %1470 = vmatpush.msra.mxu0 0.0
  %1471 = vmatpush.msra.mxu0 0.0
  %1472 = vmatpush.msra.mxu0 0.0
  %1473 = vmatpush.msra.mxu0 0.0
  %1474 = vmatpush.msra.mxu0 0.0
  %1475 = vmatpush.msra.mxu0 0.0
  %1476 = vmatpush.msra.mxu0 0.0
  %1477 = vmatpush.msra.mxu0 0.0
  %1478 = vmatpush.msra.mxu0 0.0
  %1479 = vmatpush.msra.mxu0 0.0
  %1480 = vmatpush.msra.mxu0 0.0
  %1481 = vmatpush.msra.mxu0 0.0
  %1482 = vmatpush.msra.mxu0 0.0
  %1483 = vmatpush.msra.mxu0 0.0
  %1484 = vmatpush.msra.mxu0 0.0
  %1485 = vmatpush.msra.mxu0 %v1460
  %1486 = vmatmul.f32.gmra.mxu0 %v1468
  %v1487 = vpop.f32.mrf.mxu0
  %v1488 = vadd.f32 %v1383, %v1487
  %1489 = vdwg.mxu0
  %1490 = vmatpush.msra.mxu0 0.0
  %1491 = vmatpush.msra.mxu0 0.0
  %1492 = vmatpush.msra.mxu0 0.0
  %1493 = vmatpush.msra.mxu0 0.0
  %1494 = vmatpush.msra.mxu0 0.0
  %1495 = vmatpush.msra.mxu0 0.0
  %1496 = vmatpush.msra.mxu0 0.0
  %1497 = vmatpush.msra.mxu0 0.0
  %1498 = vmatpush.msra.mxu0 0.0
  %1499 = vmatpush.msra.mxu0 0.0
  %1500 = vmatpush.msra.mxu0 0.0
  %1501 = vmatpush.msra.mxu0 0.0
  %1502 = vmatpush.msra.mxu0 0.0
  %1503 = vmatpush.msra.mxu0 0.0
  %1504 = vmatpush.msra.mxu0 0.0
  %1505 = vmatpush.msra.mxu0 %v1461
  %1506 = vmatmul.f32.gmra.mxu0 %v1468
  %v1507 = vpop.f32.mrf.mxu0
  %v1508 = vadd.f32 %v1403, %v1507
  %1509 = vdwg.mxu0
  %1510 = vmatpush.msra.mxu0 0.0
  %1511 = vmatpush.msra.mxu0 0.0
  %1512 = vmatpush.msra.mxu0 0.0
  %1513 = vmatpush.msra.mxu0 0.0
  %1514 = vmatpush.msra.mxu0 0.0
  %1515 = vmatpush.msra.mxu0 0.0
  %1516 = vmatpush.msra.mxu0 0.0
  %1517 = vmatpush.msra.mxu0 0.0
  %1518 = vmatpush.msra.mxu0 0.0
  %1519 = vmatpush.msra.mxu0 0.0
  %1520 = vmatpush.msra.mxu0 0.0
  %1521 = vmatpush.msra.mxu0 0.0
  %1522 = vmatpush.msra.mxu0 0.0
  %1523 = vmatpush.msra.mxu0 0.0
  %1524 = vmatpush.msra.mxu0 0.0
  %1525 = vmatpush.msra.mxu0 %v1462
  %1526 = vmatmul.f32.gmra.mxu0 %v1468
  %v1527 = vpop.f32.mrf.mxu0
  %v1528 = vadd.f32 %v1423, %v1527
  %1529 = vdwg.mxu0
  %1530 = vmatpush.msra.mxu0 0.0
  %1531 = vmatpush.msra.mxu0 0.0
  %1532 = vmatpush.msra.mxu0 0.0
  %1533 = vmatpush.msra.mxu0 0.0
  %1534 = vmatpush.msra.mxu0 0.0
  %1535 = vmatpush.msra.mxu0 0.0
  %1536 = vmatpush.msra.mxu0 0.0
  %1537 = vmatpush.msra.mxu0 0.0
  %1538 = vmatpush.msra.mxu0 0.0
  %1539 = vmatpush.msra.mxu0 0.0
  %1540 = vmatpush.msra.mxu0 0.0
  %1541 = vmatpush.msra.mxu0 0.0
  %1542 = vmatpush.msra.mxu0 0.0
  %1543 = vmatpush.msra.mxu0 0.0
  %1544 = vmatpush.msra.mxu0 0.0
  %1545 = vmatpush.msra.mxu0 %v1463
  %1546 = vmatmul.f32.gmra.mxu0 %v1468
  %v1547 = vpop.f32.mrf.mxu0
  %v1548 = vadd.f32 %v1443, %v1547
  %1549 = vdwg.mxu0
  %v1550 = vld [vmem:[%s5 + $0x40] sm:$0xff]
  %v1551 = vld [vmem:[%s5 + $0x48] sm:$0xff]
  %v1552 = vld [vmem:[%s5 + $0x50] sm:$0xff]
  %v1553 = vld [vmem:[%s5 + $0x58] sm:$0xff]
  %1558 = vrot.lane.b32.xlu0 %v1550, 113
  %v1559 = vpop.permute.xlu0 %1558
  %1560 = vrot.lane.b32.xlu0 %v1551, 113
  %v1561 = vpop.permute.xlu0 %1560
  %1562 = vrot.lane.b32.xlu0 %v1552, 113
  %v1563 = vpop.permute.xlu0 %1562
  %1564 = vrot.lane.b32.xlu0 %v1553, 113
  %v1565 = vpop.permute.xlu0 %1564
  %v1566 = vsel %vm334, %v1559, %v1561
  %v1567 = vsel %vm334, %v1561, %v1563
  %v1568 = vsel %vm334, %v1563, %v1565
  %v1574 = vmul.f32 %v1273, %v1559
  %v1575 = vmul.f32 %v1274, %v1566
  %v1576 = vmul.f32 %v1275, %v1567
  %v1577 = vmul.f32 %v1276, %v1568
  %v1578 = vmul.f32 %v1277, %v1565
  %1579 = vrot.lane.b32.xlu0 %v1307, 112
  %v1580 = vpop.permute.xlu0 %1579
  %1586 = vrot.lane.b32.xlu0 %v1574, 15
  %v1587 = vpop.permute.xlu0 %1586
  %1588 = vrot.lane.b32.xlu0 %v1575, 15
  %v1589 = vpop.permute.xlu0 %1588
  %1590 = vrot.lane.b32.xlu0 %v1576, 15
  %v1591 = vpop.permute.xlu0 %1590
  %1592 = vrot.lane.b32.xlu0 %v1577, 15
  %v1593 = vpop.permute.xlu0 %1592
  %1594 = vrot.lane.b32.xlu0 %v1578, 15
  %v1595 = vpop.permute.xlu0 %1594
  %v1596 = vsel %vm365, %v1587, %v1589
  %v1597 = vsel %vm365, %v1589, %v1591
  %v1598 = vsel %vm365, %v1591, %v1593
  %v1599 = vsel %vm365, %v1593, %v1595
  %v1604 = vsel %vm129, %v1580, 0
  %1606 = vmatpush.msra.mxu0 0.0
  %1607 = vmatpush.msra.mxu0 0.0
  %1608 = vmatpush.msra.mxu0 0.0
  %1609 = vmatpush.msra.mxu0 0.0
  %1610 = vmatpush.msra.mxu0 0.0
  %1611 = vmatpush.msra.mxu0 0.0
  %1612 = vmatpush.msra.mxu0 0.0
  %1613 = vmatpush.msra.mxu0 0.0
  %1614 = vmatpush.msra.mxu0 0.0
  %1615 = vmatpush.msra.mxu0 0.0
  %1616 = vmatpush.msra.mxu0 0.0
  %1617 = vmatpush.msra.mxu0 0.0
  %1618 = vmatpush.msra.mxu0 0.0
  %1619 = vmatpush.msra.mxu0 0.0
  %1620 = vmatpush.msra.mxu0 0.0
  %1621 = vmatpush.msra.mxu0 %v1596
  %1622 = vmatmul.f32.gmra.mxu0 %v1604
  %v1623 = vpop.f32.mrf.mxu0
  %v1624 = vadd.f32 0.0, %v1623
  %1625 = vdwg.mxu0
  %1626 = vmatpush.msra.mxu0 0.0
  %1627 = vmatpush.msra.mxu0 0.0
  %1628 = vmatpush.msra.mxu0 0.0
  %1629 = vmatpush.msra.mxu0 0.0
  %1630 = vmatpush.msra.mxu0 0.0
  %1631 = vmatpush.msra.mxu0 0.0
  %1632 = vmatpush.msra.mxu0 0.0
  %1633 = vmatpush.msra.mxu0 0.0
  %1634 = vmatpush.msra.mxu0 0.0
  %1635 = vmatpush.msra.mxu0 0.0
  %1636 = vmatpush.msra.mxu0 0.0
  %1637 = vmatpush.msra.mxu0 0.0
  %1638 = vmatpush.msra.mxu0 0.0
  %1639 = vmatpush.msra.mxu0 0.0
  %1640 = vmatpush.msra.mxu0 0.0
  %1641 = vmatpush.msra.mxu0 %v1597
  %1642 = vmatmul.f32.gmra.mxu0 %v1604
  %v1643 = vpop.f32.mrf.mxu0
  %v1644 = vadd.f32 0.0, %v1643
  %1645 = vdwg.mxu0
  %1646 = vmatpush.msra.mxu0 0.0
  %1647 = vmatpush.msra.mxu0 0.0
  %1648 = vmatpush.msra.mxu0 0.0
  %1649 = vmatpush.msra.mxu0 0.0
  %1650 = vmatpush.msra.mxu0 0.0
  %1651 = vmatpush.msra.mxu0 0.0
  %1652 = vmatpush.msra.mxu0 0.0
  %1653 = vmatpush.msra.mxu0 0.0
  %1654 = vmatpush.msra.mxu0 0.0
  %1655 = vmatpush.msra.mxu0 0.0
  %1656 = vmatpush.msra.mxu0 0.0
  %1657 = vmatpush.msra.mxu0 0.0
  %1658 = vmatpush.msra.mxu0 0.0
  %1659 = vmatpush.msra.mxu0 0.0
  %1660 = vmatpush.msra.mxu0 0.0
  %1661 = vmatpush.msra.mxu0 %v1598
  %1662 = vmatmul.f32.gmra.mxu0 %v1604
  %v1663 = vpop.f32.mrf.mxu0
  %v1664 = vadd.f32 0.0, %v1663
  %1665 = vdwg.mxu0
  %1666 = vmatpush.msra.mxu0 0.0
  %1667 = vmatpush.msra.mxu0 0.0
  %1668 = vmatpush.msra.mxu0 0.0
  %1669 = vmatpush.msra.mxu0 0.0
  %1670 = vmatpush.msra.mxu0 0.0
  %1671 = vmatpush.msra.mxu0 0.0
  %1672 = vmatpush.msra.mxu0 0.0
  %1673 = vmatpush.msra.mxu0 0.0
  %1674 = vmatpush.msra.mxu0 0.0
  %1675 = vmatpush.msra.mxu0 0.0
  %1676 = vmatpush.msra.mxu0 0.0
  %1677 = vmatpush.msra.mxu0 0.0
  %1678 = vmatpush.msra.mxu0 0.0
  %1679 = vmatpush.msra.mxu0 0.0
  %1680 = vmatpush.msra.mxu0 0.0
  %1681 = vmatpush.msra.mxu0 %v1599
  %1682 = vmatmul.f32.gmra.mxu0 %v1604
  %v1683 = vpop.f32.mrf.mxu0
  %v1684 = vadd.f32 0.0, %v1683
  %1685 = vdwg.mxu0
  %v1686 = vadd.f32 %v1488, %v1624
  %v1687 = vadd.f32 %v1508, %v1644
  %v1688 = vadd.f32 %v1528, %v1664
  %v1689 = vadd.f32 %v1548, %v1684
  %v1690 = vld [vmem:[%s5 + $0x60] sm:$0xff]
  %v1691 = vld [vmem:[%s5 + $0x68] sm:$0xff]
  %v1692 = vld [vmem:[%s5 + $0x70] sm:$0xff]
  %v1693 = vld [vmem:[%s5 + $0x78] sm:$0xff]
  %1698 = vrot.lane.b32.xlu0 %v1690, 127
  %v1699 = vpop.permute.xlu0 %1698
  %1700 = vrot.lane.b32.xlu0 %v1691, 127
  %v1701 = vpop.permute.xlu0 %1700
  %1702 = vrot.lane.b32.xlu0 %v1692, 127
  %v1703 = vpop.permute.xlu0 %1702
  %1704 = vrot.lane.b32.xlu0 %v1693, 127
  %v1705 = vpop.permute.xlu0 %1704
  %v1706 = vsel %vm476, %v1699, %v1701
  %v1707 = vsel %vm476, %v1701, %v1703
  %v1708 = vsel %vm476, %v1703, %v1705
  %v1714 = vmul.f32 %v1273, %v1699
  %v1715 = vmul.f32 %v1274, %v1706
  %v1716 = vmul.f32 %v1275, %v1707
  %v1717 = vmul.f32 %v1276, %v1708
  %v1718 = vmul.f32 %v1277, %v1705
  %1719 = vrot.lane.b32.xlu0 %v1307, 104
  %v1720 = vpop.permute.xlu0 %1719
  %1726 = vrot.lane.b32.xlu0 %v1714, 1
  %v1727 = vpop.permute.xlu0 %1726
  %1728 = vrot.lane.b32.xlu0 %v1715, 1
  %v1729 = vpop.permute.xlu0 %1728
  %1730 = vrot.lane.b32.xlu0 %v1716, 1
  %v1731 = vpop.permute.xlu0 %1730
  %1732 = vrot.lane.b32.xlu0 %v1717, 1
  %v1733 = vpop.permute.xlu0 %1732
  %1734 = vrot.lane.b32.xlu0 %v1718, 1
  %v1735 = vpop.permute.xlu0 %1734
  %v1736 = vsel %vm507, %v1727, %v1729
  %v1737 = vsel %vm507, %v1729, %v1731
  %v1738 = vsel %vm507, %v1731, %v1733
  %v1739 = vsel %vm507, %v1733, %v1735
  %v1744 = vsel %vm129, %v1720, 0
  %1746 = vmatpush.msra.mxu0 0.0
  %1747 = vmatpush.msra.mxu0 0.0
  %1748 = vmatpush.msra.mxu0 0.0
  %1749 = vmatpush.msra.mxu0 0.0
  %1750 = vmatpush.msra.mxu0 0.0
  %1751 = vmatpush.msra.mxu0 0.0
  %1752 = vmatpush.msra.mxu0 0.0
  %1753 = vmatpush.msra.mxu0 0.0
  %1754 = vmatpush.msra.mxu0 0.0
  %1755 = vmatpush.msra.mxu0 0.0
  %1756 = vmatpush.msra.mxu0 0.0
  %1757 = vmatpush.msra.mxu0 0.0
  %1758 = vmatpush.msra.mxu0 0.0
  %1759 = vmatpush.msra.mxu0 0.0
  %1760 = vmatpush.msra.mxu0 0.0
  %1761 = vmatpush.msra.mxu0 %v1736
  %1762 = vmatmul.f32.gmra.mxu0 %v1744
  %v1763 = vpop.f32.mrf.mxu0
  %v1764 = vadd.f32 0.0, %v1763
  %1765 = vdwg.mxu0
  %1766 = vmatpush.msra.mxu0 0.0
  %1767 = vmatpush.msra.mxu0 0.0
  %1768 = vmatpush.msra.mxu0 0.0
  %1769 = vmatpush.msra.mxu0 0.0
  %1770 = vmatpush.msra.mxu0 0.0
  %1771 = vmatpush.msra.mxu0 0.0
  %1772 = vmatpush.msra.mxu0 0.0
  %1773 = vmatpush.msra.mxu0 0.0
  %1774 = vmatpush.msra.mxu0 0.0
  %1775 = vmatpush.msra.mxu0 0.0
  %1776 = vmatpush.msra.mxu0 0.0
  %1777 = vmatpush.msra.mxu0 0.0
  %1778 = vmatpush.msra.mxu0 0.0
  %1779 = vmatpush.msra.mxu0 0.0
  %1780 = vmatpush.msra.mxu0 0.0
  %1781 = vmatpush.msra.mxu0 %v1737
  %1782 = vmatmul.f32.gmra.mxu0 %v1744
  %v1783 = vpop.f32.mrf.mxu0
  %v1784 = vadd.f32 0.0, %v1783
  %1785 = vdwg.mxu0
  %1786 = vmatpush.msra.mxu0 0.0
  %1787 = vmatpush.msra.mxu0 0.0
  %1788 = vmatpush.msra.mxu0 0.0
  %1789 = vmatpush.msra.mxu0 0.0
  %1790 = vmatpush.msra.mxu0 0.0
  %1791 = vmatpush.msra.mxu0 0.0
  %1792 = vmatpush.msra.mxu0 0.0
  %1793 = vmatpush.msra.mxu0 0.0
  %1794 = vmatpush.msra.mxu0 0.0
  %1795 = vmatpush.msra.mxu0 0.0
  %1796 = vmatpush.msra.mxu0 0.0
  %1797 = vmatpush.msra.mxu0 0.0
  %1798 = vmatpush.msra.mxu0 0.0
  %1799 = vmatpush.msra.mxu0 0.0
  %1800 = vmatpush.msra.mxu0 0.0
  %1801 = vmatpush.msra.mxu0 %v1738
  %1802 = vmatmul.f32.gmra.mxu0 %v1744
  %v1803 = vpop.f32.mrf.mxu0
  %v1804 = vadd.f32 0.0, %v1803
  %1805 = vdwg.mxu0
  %1806 = vmatpush.msra.mxu0 0.0
  %1807 = vmatpush.msra.mxu0 0.0
  %1808 = vmatpush.msra.mxu0 0.0
  %1809 = vmatpush.msra.mxu0 0.0
  %1810 = vmatpush.msra.mxu0 0.0
  %1811 = vmatpush.msra.mxu0 0.0
  %1812 = vmatpush.msra.mxu0 0.0
  %1813 = vmatpush.msra.mxu0 0.0
  %1814 = vmatpush.msra.mxu0 0.0
  %1815 = vmatpush.msra.mxu0 0.0
  %1816 = vmatpush.msra.mxu0 0.0
  %1817 = vmatpush.msra.mxu0 0.0
  %1818 = vmatpush.msra.mxu0 0.0
  %1819 = vmatpush.msra.mxu0 0.0
  %1820 = vmatpush.msra.mxu0 0.0
  %1821 = vmatpush.msra.mxu0 %v1739
  %1822 = vmatmul.f32.gmra.mxu0 %v1744
  %v1823 = vpop.f32.mrf.mxu0
  %v1824 = vadd.f32 0.0, %v1823
  %1825 = vdwg.mxu0
  %v1826 = vadd.f32 %v1686, %v1764
  %v1827 = vadd.f32 %v1687, %v1784
  %v1828 = vadd.f32 %v1688, %v1804
  %v1829 = vadd.f32 %v1689, %v1824
  %1830 = vrot.lane.b32.xlu0 %v1307, 96
  %v1831 = vpop.permute.xlu0 %1830
  %v1832 = vsel %vm129, %v1831, 0
  %1834 = vmatpush.msra.mxu0 0.0
  %1835 = vmatpush.msra.mxu0 0.0
  %1836 = vmatpush.msra.mxu0 0.0
  %1837 = vmatpush.msra.mxu0 0.0
  %1838 = vmatpush.msra.mxu0 0.0
  %1839 = vmatpush.msra.mxu0 0.0
  %1840 = vmatpush.msra.mxu0 0.0
  %1841 = vmatpush.msra.mxu0 0.0
  %1842 = vmatpush.msra.mxu0 0.0
  %1843 = vmatpush.msra.mxu0 0.0
  %1844 = vmatpush.msra.mxu0 0.0
  %1845 = vmatpush.msra.mxu0 0.0
  %1846 = vmatpush.msra.mxu0 0.0
  %1847 = vmatpush.msra.mxu0 0.0
  %1848 = vmatpush.msra.mxu0 0.0
  %1849 = vmatpush.msra.mxu0 %v1274
  %1850 = vmatmul.f32.gmra.mxu0 %v1832
  %v1851 = vpop.f32.mrf.mxu0
  %v1852 = vadd.f32 0.0, %v1851
  %1853 = vdwg.mxu0
  %1854 = vmatpush.msra.mxu0 0.0
  %1855 = vmatpush.msra.mxu0 0.0
  %1856 = vmatpush.msra.mxu0 0.0
  %1857 = vmatpush.msra.mxu0 0.0
  %1858 = vmatpush.msra.mxu0 0.0
  %1859 = vmatpush.msra.mxu0 0.0
  %1860 = vmatpush.msra.mxu0 0.0
  %1861 = vmatpush.msra.mxu0 0.0
  %1862 = vmatpush.msra.mxu0 0.0
  %1863 = vmatpush.msra.mxu0 0.0
  %1864 = vmatpush.msra.mxu0 0.0
  %1865 = vmatpush.msra.mxu0 0.0
  %1866 = vmatpush.msra.mxu0 0.0
  %1867 = vmatpush.msra.mxu0 0.0
  %1868 = vmatpush.msra.mxu0 0.0
  %1869 = vmatpush.msra.mxu0 %v1275
  %1870 = vmatmul.f32.gmra.mxu0 %v1832
  %v1871 = vpop.f32.mrf.mxu0
  %v1872 = vadd.f32 0.0, %v1871
  %1873 = vdwg.mxu0
  %1874 = vmatpush.msra.mxu0 0.0
  %1875 = vmatpush.msra.mxu0 0.0
  %1876 = vmatpush.msra.mxu0 0.0
  %1877 = vmatpush.msra.mxu0 0.0
  %1878 = vmatpush.msra.mxu0 0.0
  %1879 = vmatpush.msra.mxu0 0.0
  %1880 = vmatpush.msra.mxu0 0.0
  %1881 = vmatpush.msra.mxu0 0.0
  %1882 = vmatpush.msra.mxu0 0.0
  %1883 = vmatpush.msra.mxu0 0.0
  %1884 = vmatpush.msra.mxu0 0.0
  %1885 = vmatpush.msra.mxu0 0.0
  %1886 = vmatpush.msra.mxu0 0.0
  %1887 = vmatpush.msra.mxu0 0.0
  %1888 = vmatpush.msra.mxu0 0.0
  %1889 = vmatpush.msra.mxu0 %v1276
  %1890 = vmatmul.f32.gmra.mxu0 %v1832
  %v1891 = vpop.f32.mrf.mxu0
  %v1892 = vadd.f32 0.0, %v1891
  %1893 = vdwg.mxu0
  %1894 = vmatpush.msra.mxu0 0.0
  %1895 = vmatpush.msra.mxu0 0.0
  %1896 = vmatpush.msra.mxu0 0.0
  %1897 = vmatpush.msra.mxu0 0.0
  %1898 = vmatpush.msra.mxu0 0.0
  %1899 = vmatpush.msra.mxu0 0.0
  %1900 = vmatpush.msra.mxu0 0.0
  %1901 = vmatpush.msra.mxu0 0.0
  %1902 = vmatpush.msra.mxu0 0.0
  %1903 = vmatpush.msra.mxu0 0.0
  %1904 = vmatpush.msra.mxu0 0.0
  %1905 = vmatpush.msra.mxu0 0.0
  %1906 = vmatpush.msra.mxu0 0.0
  %1907 = vmatpush.msra.mxu0 0.0
  %1908 = vmatpush.msra.mxu0 0.0
  %1909 = vmatpush.msra.mxu0 %v1277
  %1910 = vmatmul.f32.gmra.mxu0 %v1832
  %v1911 = vpop.f32.mrf.mxu0
  %v1912 = vadd.f32 0.0, %v1911
  %1913 = vdwg.mxu0
  %v1914 = vadd.f32 %v1826, %v1852
  %v1915 = vadd.f32 %v1827, %v1872
  %v1916 = vadd.f32 %v1828, %v1892
  %v1917 = vadd.f32 %v1829, %v1912
  %v1918 = vld [vmem:[#allocation2 + $0x8] sm:$0xff]
  %v1919 = vld [vmem:[#allocation2 + $0x10] sm:$0xff]
  %v1920 = vld [vmem:[#allocation2 + $0x18] sm:$0xff]
  %v1921 = vld [vmem:[#allocation2 + $0x20] sm:$0xff]
  %v1922 = vld [vmem:[#allocation2 + $0x28] sm:$0xff]
  %v1923 = vld [vmem:[%s5 + $0xa0] sm:$0xff]
  %v1924 = vld [vmem:[%s5 + $0xa8] sm:$0xff]
  %v1925 = vld [vmem:[%s5 + $0xb0] sm:$0xff]
  %v1926 = vld [vmem:[%s5 + $0xb8] sm:$0xff]
  %1931 = vrot.lane.b32.xlu0 %v1923, 1
  %v1932 = vpop.permute.xlu0 %1931
  %1933 = vrot.lane.b32.xlu0 %v1924, 1
  %v1934 = vpop.permute.xlu0 %1933
  %1935 = vrot.lane.b32.xlu0 %v1925, 1
  %v1936 = vpop.permute.xlu0 %1935
  %1937 = vrot.lane.b32.xlu0 %v1926, 1
  %v1938 = vpop.permute.xlu0 %1937
  %v1939 = vsel %vm507, %v1932, %v1934
  %v1940 = vsel %vm507, %v1934, %v1936
  %v1941 = vsel %vm507, %v1936, %v1938
  %v1947 = vmul.f32 %v1918, %v1932
  %v1948 = vmul.f32 %v1919, %v1939
  %v1949 = vmul.f32 %v1920, %v1940
  %v1950 = vmul.f32 %v1921, %v1941
  %v1951 = vmul.f32 %v1922, %v1938
  %1952 = vrot.lane.b32.xlu0 %v1307, 88
  %v1953 = vpop.permute.xlu0 %1952
  %1959 = vrot.lane.b32.xlu0 %v1947, 127
  %v1960 = vpop.permute.xlu0 %1959
  %1961 = vrot.lane.b32.xlu0 %v1948, 127
  %v1962 = vpop.permute.xlu0 %1961
  %1963 = vrot.lane.b32.xlu0 %v1949, 127
  %v1964 = vpop.permute.xlu0 %1963
  %1965 = vrot.lane.b32.xlu0 %v1950, 127
  %v1966 = vpop.permute.xlu0 %1965
  %1967 = vrot.lane.b32.xlu0 %v1951, 127
  %v1968 = vpop.permute.xlu0 %1967
  %v1969 = vsel %vm476, %v1960, %v1962
  %v1970 = vsel %vm476, %v1962, %v1964
  %v1971 = vsel %vm476, %v1964, %v1966
  %v1972 = vsel %vm476, %v1966, %v1968
  %v1977 = vsel %vm129, %v1953, 0
  %1979 = vmatpush.msra.mxu0 0.0
  %1980 = vmatpush.msra.mxu0 0.0
  %1981 = vmatpush.msra.mxu0 0.0
  %1982 = vmatpush.msra.mxu0 0.0
  %1983 = vmatpush.msra.mxu0 0.0
  %1984 = vmatpush.msra.mxu0 0.0
  %1985 = vmatpush.msra.mxu0 0.0
  %1986 = vmatpush.msra.mxu0 0.0
  %1987 = vmatpush.msra.mxu0 0.0
  %1988 = vmatpush.msra.mxu0 0.0
  %1989 = vmatpush.msra.mxu0 0.0
  %1990 = vmatpush.msra.mxu0 0.0
  %1991 = vmatpush.msra.mxu0 0.0
  %1992 = vmatpush.msra.mxu0 0.0
  %1993 = vmatpush.msra.mxu0 0.0
  %1994 = vmatpush.msra.mxu0 %v1969
  %1995 = vmatmul.f32.gmra.mxu0 %v1977
  %v1996 = vpop.f32.mrf.mxu0
  %v1997 = vadd.f32 0.0, %v1996
  %1998 = vdwg.mxu0
  %1999 = vmatpush.msra.mxu0 0.0
  %2000 = vmatpush.msra.mxu0 0.0
  %2001 = vmatpush.msra.mxu0 0.0
  %2002 = vmatpush.msra.mxu0 0.0
  %2003 = vmatpush.msra.mxu0 0.0
  %2004 = vmatpush.msra.mxu0 0.0
  %2005 = vmatpush.msra.mxu0 0.0
  %2006 = vmatpush.msra.mxu0 0.0
  %2007 = vmatpush.msra.mxu0 0.0
  %2008 = vmatpush.msra.mxu0 0.0
  %2009 = vmatpush.msra.mxu0 0.0
  %2010 = vmatpush.msra.mxu0 0.0
  %2011 = vmatpush.msra.mxu0 0.0
  %2012 = vmatpush.msra.mxu0 0.0
  %2013 = vmatpush.msra.mxu0 0.0
  %2014 = vmatpush.msra.mxu0 %v1970
  %2015 = vmatmul.f32.gmra.mxu0 %v1977
  %v2016 = vpop.f32.mrf.mxu0
  %v2017 = vadd.f32 0.0, %v2016
  %2018 = vdwg.mxu0
  %2019 = vmatpush.msra.mxu0 0.0
  %2020 = vmatpush.msra.mxu0 0.0
  %2021 = vmatpush.msra.mxu0 0.0
  %2022 = vmatpush.msra.mxu0 0.0
  %2023 = vmatpush.msra.mxu0 0.0
  %2024 = vmatpush.msra.mxu0 0.0
  %2025 = vmatpush.msra.mxu0 0.0
  %2026 = vmatpush.msra.mxu0 0.0
  %2027 = vmatpush.msra.mxu0 0.0
  %2028 = vmatpush.msra.mxu0 0.0
  %2029 = vmatpush.msra.mxu0 0.0
  %2030 = vmatpush.msra.mxu0 0.0
  %2031 = vmatpush.msra.mxu0 0.0
  %2032 = vmatpush.msra.mxu0 0.0
  %2033 = vmatpush.msra.mxu0 0.0
  %2034 = vmatpush.msra.mxu0 %v1971
  %2035 = vmatmul.f32.gmra.mxu0 %v1977
  %v2036 = vpop.f32.mrf.mxu0
  %v2037 = vadd.f32 0.0, %v2036
  %2038 = vdwg.mxu0
  %2039 = vmatpush.msra.mxu0 0.0
  %2040 = vmatpush.msra.mxu0 0.0
  %2041 = vmatpush.msra.mxu0 0.0
  %2042 = vmatpush.msra.mxu0 0.0
  %2043 = vmatpush.msra.mxu0 0.0
  %2044 = vmatpush.msra.mxu0 0.0
  %2045 = vmatpush.msra.mxu0 0.0
  %2046 = vmatpush.msra.mxu0 0.0
  %2047 = vmatpush.msra.mxu0 0.0
  %2048 = vmatpush.msra.mxu0 0.0
  %2049 = vmatpush.msra.mxu0 0.0
  %2050 = vmatpush.msra.mxu0 0.0
  %2051 = vmatpush.msra.mxu0 0.0
  %2052 = vmatpush.msra.mxu0 0.0
  %2053 = vmatpush.msra.mxu0 0.0
  %2054 = vmatpush.msra.mxu0 %v1972
  %2055 = vmatmul.f32.gmra.mxu0 %v1977
  %v2056 = vpop.f32.mrf.mxu0
  %v2057 = vadd.f32 0.0, %v2056
  %2058 = vdwg.mxu0
  %v2059 = vadd.f32 %v1914, %v1997
  %v2060 = vadd.f32 %v1915, %v2017
  %v2061 = vadd.f32 %v1916, %v2037
  %v2062 = vadd.f32 %v1917, %v2057
  %v2063 = vld [vmem:[%s5 + $0xc0] sm:$0xff]
  %v2064 = vld [vmem:[%s5 + $0xc8] sm:$0xff]
  %v2065 = vld [vmem:[%s5 + $0xd0] sm:$0xff]
  %v2066 = vld [vmem:[%s5 + $0xd8] sm:$0xff]
  %2071 = vrot.lane.b32.xlu0 %v2063, 15
  %v2072 = vpop.permute.xlu0 %2071
  %2073 = vrot.lane.b32.xlu0 %v2064, 15
  %v2074 = vpop.permute.xlu0 %2073
  %2075 = vrot.lane.b32.xlu0 %v2065, 15
  %v2076 = vpop.permute.xlu0 %2075
  %2077 = vrot.lane.b32.xlu0 %v2066, 15
  %v2078 = vpop.permute.xlu0 %2077
  %v2079 = vsel %vm365, %v2072, %v2074
  %v2080 = vsel %vm365, %v2074, %v2076
  %v2081 = vsel %vm365, %v2076, %v2078
  %v2087 = vmul.f32 %v1918, %v2072
  %v2088 = vmul.f32 %v1919, %v2079
  %v2089 = vmul.f32 %v1920, %v2080
  %v2090 = vmul.f32 %v1921, %v2081
  %v2091 = vmul.f32 %v1922, %v2078
  %2092 = vrot.lane.b32.xlu0 %v1307, 80
  %v2093 = vpop.permute.xlu0 %2092
  %2099 = vrot.lane.b32.xlu0 %v2087, 113
  %v2100 = vpop.permute.xlu0 %2099
  %2101 = vrot.lane.b32.xlu0 %v2088, 113
  %v2102 = vpop.permute.xlu0 %2101
  %2103 = vrot.lane.b32.xlu0 %v2089, 113
  %v2104 = vpop.permute.xlu0 %2103
  %2105 = vrot.lane.b32.xlu0 %v2090, 113
  %v2106 = vpop.permute.xlu0 %2105
  %2107 = vrot.lane.b32.xlu0 %v2091, 113
  %v2108 = vpop.permute.xlu0 %2107
  %v2109 = vsel %vm334, %v2100, %v2102
  %v2110 = vsel %vm334, %v2102, %v2104
  %v2111 = vsel %vm334, %v2104, %v2106
  %v2112 = vsel %vm334, %v2106, %v2108
  %v2117 = vsel %vm129, %v2093, 0
  %2119 = vmatpush.msra.mxu0 0.0
  %2120 = vmatpush.msra.mxu0 0.0
  %2121 = vmatpush.msra.mxu0 0.0
  %2122 = vmatpush.msra.mxu0 0.0
  %2123 = vmatpush.msra.mxu0 0.0
  %2124 = vmatpush.msra.mxu0 0.0
  %2125 = vmatpush.msra.mxu0 0.0
  %2126 = vmatpush.msra.mxu0 0.0
  %2127 = vmatpush.msra.mxu0 0.0
  %2128 = vmatpush.msra.mxu0 0.0
  %2129 = vmatpush.msra.mxu0 0.0
  %2130 = vmatpush.msra.mxu0 0.0
  %2131 = vmatpush.msra.mxu0 0.0
  %2132 = vmatpush.msra.mxu0 0.0
  %2133 = vmatpush.msra.mxu0 0.0
  %2134 = vmatpush.msra.mxu0 %v2109
  %2135 = vmatmul.f32.gmra.mxu0 %v2117
  %v2136 = vpop.f32.mrf.mxu0
  %v2137 = vadd.f32 0.0, %v2136
  %2138 = vdwg.mxu0
  %2139 = vmatpush.msra.mxu0 0.0
  %2140 = vmatpush.msra.mxu0 0.0
  %2141 = vmatpush.msra.mxu0 0.0
  %2142 = vmatpush.msra.mxu0 0.0
  %2143 = vmatpush.msra.mxu0 0.0
  %2144 = vmatpush.msra.mxu0 0.0
  %2145 = vmatpush.msra.mxu0 0.0
  %2146 = vmatpush.msra.mxu0 0.0
  %2147 = vmatpush.msra.mxu0 0.0
  %2148 = vmatpush.msra.mxu0 0.0
  %2149 = vmatpush.msra.mxu0 0.0
  %2150 = vmatpush.msra.mxu0 0.0
  %2151 = vmatpush.msra.mxu0 0.0
  %2152 = vmatpush.msra.mxu0 0.0
  %2153 = vmatpush.msra.mxu0 0.0
  %2154 = vmatpush.msra.mxu0 %v2110
  %2155 = vmatmul.f32.gmra.mxu0 %v2117
  %v2156 = vpop.f32.mrf.mxu0
  %v2157 = vadd.f32 0.0, %v2156
  %2158 = vdwg.mxu0
  %2159 = vmatpush.msra.mxu0 0.0
  %2160 = vmatpush.msra.mxu0 0.0
  %2161 = vmatpush.msra.mxu0 0.0
  %2162 = vmatpush.msra.mxu0 0.0
  %2163 = vmatpush.msra.mxu0 0.0
  %2164 = vmatpush.msra.mxu0 0.0
  %2165 = vmatpush.msra.mxu0 0.0
  %2166 = vmatpush.msra.mxu0 0.0
  %2167 = vmatpush.msra.mxu0 0.0
  %2168 = vmatpush.msra.mxu0 0.0
  %2169 = vmatpush.msra.mxu0 0.0
  %2170 = vmatpush.msra.mxu0 0.0
  %2171 = vmatpush.msra.mxu0 0.0
  %2172 = vmatpush.msra.mxu0 0.0
  %2173 = vmatpush.msra.mxu0 0.0
  %2174 = vmatpush.msra.mxu0 %v2111
  %2175 = vmatmul.f32.gmra.mxu0 %v2117
  %v2176 = vpop.f32.mrf.mxu0
  %v2177 = vadd.f32 0.0, %v2176
  %2178 = vdwg.mxu0
  %2179 = vmatpush.msra.mxu0 0.0
  %2180 = vmatpush.msra.mxu0 0.0
  %2181 = vmatpush.msra.mxu0 0.0
  %2182 = vmatpush.msra.mxu0 0.0
  %2183 = vmatpush.msra.mxu0 0.0
  %2184 = vmatpush.msra.mxu0 0.0
  %2185 = vmatpush.msra.mxu0 0.0
  %2186 = vmatpush.msra.mxu0 0.0
  %2187 = vmatpush.msra.mxu0 0.0
  %2188 = vmatpush.msra.mxu0 0.0
  %2189 = vmatpush.msra.mxu0 0.0
  %2190 = vmatpush.msra.mxu0 0.0
  %2191 = vmatpush.msra.mxu0 0.0
  %2192 = vmatpush.msra.mxu0 0.0
  %2193 = vmatpush.msra.mxu0 0.0
  %2194 = vmatpush.msra.mxu0 %v2112
  %2195 = vmatmul.f32.gmra.mxu0 %v2117
  %v2196 = vpop.f32.mrf.mxu0
  %v2197 = vadd.f32 0.0, %v2196
  %2198 = vdwg.mxu0
  %v2199 = vadd.f32 %v2059, %v2137
  %v2200 = vadd.f32 %v2060, %v2157
  %v2201 = vadd.f32 %v2061, %v2177
  %v2202 = vadd.f32 %v2062, %v2197
  %v2203 = vld [vmem:[%s5 + $0xe0] sm:$0xff]
  %v2204 = vld [vmem:[%s5 + $0xe8] sm:$0xff]
  %v2205 = vld [vmem:[%s5 + $0xf0] sm:$0xff]
  %v2206 = vld [vmem:[%s5 + $0xf8] sm:$0xff]
  %2211 = vrot.lane.b32.xlu0 %v2203, 16
  %v2212 = vpop.permute.xlu0 %2211
  %2213 = vrot.lane.b32.xlu0 %v2204, 16
  %v2214 = vpop.permute.xlu0 %2213
  %2215 = vrot.lane.b32.xlu0 %v2205, 16
  %v2216 = vpop.permute.xlu0 %2215
  %2217 = vrot.lane.b32.xlu0 %v2206, 16
  %v2218 = vpop.permute.xlu0 %2217
  %v2219 = vsel %vm120, %v2212, %v2214
  %v2220 = vsel %vm120, %v2214, %v2216
  %v2221 = vsel %vm120, %v2216, %v2218
  %v2227 = vmul.f32 %v1918, %v2212
  %v2228 = vmul.f32 %v1919, %v2219
  %v2229 = vmul.f32 %v1920, %v2220
  %v2230 = vmul.f32 %v1921, %v2221
  %v2231 = vmul.f32 %v1922, %v2218
  %2232 = vrot.lane.b32.xlu0 %v1307, 72
  %v2233 = vpop.permute.xlu0 %2232
  %2239 = vrot.lane.b32.xlu0 %v2227, 112
  %v2240 = vpop.permute.xlu0 %2239
  %2241 = vrot.lane.b32.xlu0 %v2228, 112
  %v2242 = vpop.permute.xlu0 %2241
  %2243 = vrot.lane.b32.xlu0 %v2229, 112
  %v2244 = vpop.permute.xlu0 %2243
  %2245 = vrot.lane.b32.xlu0 %v2230, 112
  %v2246 = vpop.permute.xlu0 %2245
  %2247 = vrot.lane.b32.xlu0 %v2231, 112
  %v2248 = vpop.permute.xlu0 %2247
  %v2249 = vsel %vm88, %v2240, %v2242
  %v2250 = vsel %vm88, %v2242, %v2244
  %v2251 = vsel %vm88, %v2244, %v2246
  %v2252 = vsel %vm88, %v2246, %v2248
  %v2257 = vsel %vm129, %v2233, 0
  %2259 = vmatpush.msra.mxu0 0.0
  %2260 = vmatpush.msra.mxu0 0.0
  %2261 = vmatpush.msra.mxu0 0.0
  %2262 = vmatpush.msra.mxu0 0.0
  %2263 = vmatpush.msra.mxu0 0.0
  %2264 = vmatpush.msra.mxu0 0.0
  %2265 = vmatpush.msra.mxu0 0.0
  %2266 = vmatpush.msra.mxu0 0.0
  %2267 = vmatpush.msra.mxu0 0.0
  %2268 = vmatpush.msra.mxu0 0.0
  %2269 = vmatpush.msra.mxu0 0.0
  %2270 = vmatpush.msra.mxu0 0.0
  %2271 = vmatpush.msra.mxu0 0.0
  %2272 = vmatpush.msra.mxu0 0.0
  %2273 = vmatpush.msra.mxu0 0.0
  %2274 = vmatpush.msra.mxu0 %v2249
  %2275 = vmatmul.f32.gmra.mxu0 %v2257
  %v2276 = vpop.f32.mrf.mxu0
  %v2277 = vadd.f32 0.0, %v2276
  %2278 = vdwg.mxu0
  %2279 = vmatpush.msra.mxu0 0.0
  %2280 = vmatpush.msra.mxu0 0.0
  %2281 = vmatpush.msra.mxu0 0.0
  %2282 = vmatpush.msra.mxu0 0.0
  %2283 = vmatpush.msra.mxu0 0.0
  %2284 = vmatpush.msra.mxu0 0.0
  %2285 = vmatpush.msra.mxu0 0.0
  %2286 = vmatpush.msra.mxu0 0.0
  %2287 = vmatpush.msra.mxu0 0.0
  %2288 = vmatpush.msra.mxu0 0.0
  %2289 = vmatpush.msra.mxu0 0.0
  %2290 = vmatpush.msra.mxu0 0.0
  %2291 = vmatpush.msra.mxu0 0.0
  %2292 = vmatpush.msra.mxu0 0.0
  %2293 = vmatpush.msra.mxu0 0.0
  %2294 = vmatpush.msra.mxu0 %v2250
  %2295 = vmatmul.f32.gmra.mxu0 %v2257
  %v2296 = vpop.f32.mrf.mxu0
  %v2297 = vadd.f32 0.0, %v2296
  %2298 = vdwg.mxu0
  %2299 = vmatpush.msra.mxu0 0.0
  %2300 = vmatpush.msra.mxu0 0.0
  %2301 = vmatpush.msra.mxu0 0.0
  %2302 = vmatpush.msra.mxu0 0.0
  %2303 = vmatpush.msra.mxu0 0.0
  %2304 = vmatpush.msra.mxu0 0.0
  %2305 = vmatpush.msra.mxu0 0.0
  %2306 = vmatpush.msra.mxu0 0.0
  %2307 = vmatpush.msra.mxu0 0.0
  %2308 = vmatpush.msra.mxu0 0.0
  %2309 = vmatpush.msra.mxu0 0.0
  %2310 = vmatpush.msra.mxu0 0.0
  %2311 = vmatpush.msra.mxu0 0.0
  %2312 = vmatpush.msra.mxu0 0.0
  %2313 = vmatpush.msra.mxu0 0.0
  %2314 = vmatpush.msra.mxu0 %v2251
  %2315 = vmatmul.f32.gmra.mxu0 %v2257
  %v2316 = vpop.f32.mrf.mxu0
  %v2317 = vadd.f32 0.0, %v2316
  %2318 = vdwg.mxu0
  %2319 = vmatpush.msra.mxu0 0.0
  %2320 = vmatpush.msra.mxu0 0.0
  %2321 = vmatpush.msra.mxu0 0.0
  %2322 = vmatpush.msra.mxu0 0.0
  %2323 = vmatpush.msra.mxu0 0.0
  %2324 = vmatpush.msra.mxu0 0.0
  %2325 = vmatpush.msra.mxu0 0.0
  %2326 = vmatpush.msra.mxu0 0.0
  %2327 = vmatpush.msra.mxu0 0.0
  %2328 = vmatpush.msra.mxu0 0.0
  %2329 = vmatpush.msra.mxu0 0.0
  %2330 = vmatpush.msra.mxu0 0.0
  %2331 = vmatpush.msra.mxu0 0.0
  %2332 = vmatpush.msra.mxu0 0.0
  %2333 = vmatpush.msra.mxu0 0.0
  %2334 = vmatpush.msra.mxu0 %v2252
  %2335 = vmatmul.f32.gmra.mxu0 %v2257
  %v2336 = vpop.f32.mrf.mxu0
  %v2337 = vadd.f32 0.0, %v2336
  %2338 = vdwg.mxu0
  %v2339 = vadd.f32 %v2199, %v2277
  %v2340 = vadd.f32 %v2200, %v2297
  %v2341 = vadd.f32 %v2201, %v2317
  %v2342 = vadd.f32 %v2202, %v2337
  %v2343 = vld [vmem:[%s5 + $0x100] sm:$0xff]
  %v2344 = vld [vmem:[%s5 + $0x108] sm:$0xff]
  %v2345 = vld [vmem:[%s5 + $0x110] sm:$0xff]
  %v2346 = vld [vmem:[%s5 + $0x118] sm:$0xff]
  %2351 = vrot.lane.b32.xlu0 %v2343, 17
  %v2352 = vpop.permute.xlu0 %2351
  %2353 = vrot.lane.b32.xlu0 %v2344, 17
  %v2354 = vpop.permute.xlu0 %2353
  %2355 = vrot.lane.b32.xlu0 %v2345, 17
  %v2356 = vpop.permute.xlu0 %2355
  %2357 = vrot.lane.b32.xlu0 %v2346, 17
  %v2358 = vpop.permute.xlu0 %2357
  %v2359 = vsel %vm227, %v2352, %v2354
  %v2360 = vsel %vm227, %v2354, %v2356
  %v2361 = vsel %vm227, %v2356, %v2358
  %v2367 = vmul.f32 %v1918, %v2352
  %v2368 = vmul.f32 %v1919, %v2359
  %v2369 = vmul.f32 %v1920, %v2360
  %v2370 = vmul.f32 %v1921, %v2361
  %v2371 = vmul.f32 %v1922, %v2358
  %2372 = vrot.lane.b32.xlu0 %v1307, 64
  %v2373 = vpop.permute.xlu0 %2372
  %2379 = vrot.lane.b32.xlu0 %v2367, 111
  %v2380 = vpop.permute.xlu0 %2379
  %2381 = vrot.lane.b32.xlu0 %v2368, 111
  %v2382 = vpop.permute.xlu0 %2381
  %2383 = vrot.lane.b32.xlu0 %v2369, 111
  %v2384 = vpop.permute.xlu0 %2383
  %2385 = vrot.lane.b32.xlu0 %v2370, 111
  %v2386 = vpop.permute.xlu0 %2385
  %2387 = vrot.lane.b32.xlu0 %v2371, 111
  %v2388 = vpop.permute.xlu0 %2387
  %v2389 = vsel %vm57, %v2380, %v2382
  %v2390 = vsel %vm57, %v2382, %v2384
  %v2391 = vsel %vm57, %v2384, %v2386
  %v2392 = vsel %vm57, %v2386, %v2388
  %v2397 = vsel %vm129, %v2373, 0
  %2399 = vmatpush.msra.mxu0 0.0
  %2400 = vmatpush.msra.mxu0 0.0
  %2401 = vmatpush.msra.mxu0 0.0
  %2402 = vmatpush.msra.mxu0 0.0
  %2403 = vmatpush.msra.mxu0 0.0
  %2404 = vmatpush.msra.mxu0 0.0
  %2405 = vmatpush.msra.mxu0 0.0
  %2406 = vmatpush.msra.mxu0 0.0
  %2407 = vmatpush.msra.mxu0 0.0
  %2408 = vmatpush.msra.mxu0 0.0
  %2409 = vmatpush.msra.mxu0 0.0
  %2410 = vmatpush.msra.mxu0 0.0
  %2411 = vmatpush.msra.mxu0 0.0
  %2412 = vmatpush.msra.mxu0 0.0
  %2413 = vmatpush.msra.mxu0 0.0
  %2414 = vmatpush.msra.mxu0 %v2389
  %2415 = vmatmul.f32.gmra.mxu0 %v2397
  %v2416 = vpop.f32.mrf.mxu0
  %v2417 = vadd.f32 0.0, %v2416
  %2418 = vdwg.mxu0
  %2419 = vmatpush.msra.mxu0 0.0
  %2420 = vmatpush.msra.mxu0 0.0
  %2421 = vmatpush.msra.mxu0 0.0
  %2422 = vmatpush.msra.mxu0 0.0
  %2423 = vmatpush.msra.mxu0 0.0
  %2424 = vmatpush.msra.mxu0 0.0
  %2425 = vmatpush.msra.mxu0 0.0
  %2426 = vmatpush.msra.mxu0 0.0
  %2427 = vmatpush.msra.mxu0 0.0
  %2428 = vmatpush.msra.mxu0 0.0
  %2429 = vmatpush.msra.mxu0 0.0
  %2430 = vmatpush.msra.mxu0 0.0
  %2431 = vmatpush.msra.mxu0 0.0
  %2432 = vmatpush.msra.mxu0 0.0
  %2433 = vmatpush.msra.mxu0 0.0
  %2434 = vmatpush.msra.mxu0 %v2390
  %2435 = vmatmul.f32.gmra.mxu0 %v2397
  %v2436 = vpop.f32.mrf.mxu0
  %v2437 = vadd.f32 0.0, %v2436
  %2438 = vdwg.mxu0
  %2439 = vmatpush.msra.mxu0 0.0
  %2440 = vmatpush.msra.mxu0 0.0
  %2441 = vmatpush.msra.mxu0 0.0
  %2442 = vmatpush.msra.mxu0 0.0
  %2443 = vmatpush.msra.mxu0 0.0
  %2444 = vmatpush.msra.mxu0 0.0
  %2445 = vmatpush.msra.mxu0 0.0
  %2446 = vmatpush.msra.mxu0 0.0
  %2447 = vmatpush.msra.mxu0 0.0
  %2448 = vmatpush.msra.mxu0 0.0
  %2449 = vmatpush.msra.mxu0 0.0
  %2450 = vmatpush.msra.mxu0 0.0
  %2451 = vmatpush.msra.mxu0 0.0
  %2452 = vmatpush.msra.mxu0 0.0
  %2453 = vmatpush.msra.mxu0 0.0
  %2454 = vmatpush.msra.mxu0 %v2391
  %2455 = vmatmul.f32.gmra.mxu0 %v2397
  %v2456 = vpop.f32.mrf.mxu0
  %v2457 = vadd.f32 0.0, %v2456
  %2458 = vdwg.mxu0
  %2459 = vmatpush.msra.mxu0 0.0
  %2460 = vmatpush.msra.mxu0 0.0
  %2461 = vmatpush.msra.mxu0 0.0
  %2462 = vmatpush.msra.mxu0 0.0
  %2463 = vmatpush.msra.mxu0 0.0
  %2464 = vmatpush.msra.mxu0 0.0
  %2465 = vmatpush.msra.mxu0 0.0
  %2466 = vmatpush.msra.mxu0 0.0
  %2467 = vmatpush.msra.mxu0 0.0
  %2468 = vmatpush.msra.mxu0 0.0
  %2469 = vmatpush.msra.mxu0 0.0
  %2470 = vmatpush.msra.mxu0 0.0
  %2471 = vmatpush.msra.mxu0 0.0
  %2472 = vmatpush.msra.mxu0 0.0
  %2473 = vmatpush.msra.mxu0 0.0
  %2474 = vmatpush.msra.mxu0 %v2392
  %2475 = vmatmul.f32.gmra.mxu0 %v2397
  %v2476 = vpop.f32.mrf.mxu0
  %v2477 = vadd.f32 0.0, %v2476
  %2478 = vdwg.mxu0
  %v2479 = vadd.f32 %v2339, %v2417
  %v2480 = vadd.f32 %v2340, %v2437
  %v2481 = vadd.f32 %v2341, %v2457
  %v2482 = vadd.f32 %v2342, %v2477
  %v2483 = vld [vmem:[%s4] sm:$0xff]
  %2485 = vset.pattern.permute.xlu0 0
  %2486 = vperm.xlu0 %2485, %v2483
  %v2487 = vpop.permute.xlu0 %2486
  %v2489 = vadd.f32 %v2479, %v2487
  %v2490 = vadd.f32 %v2480, %v2487
  %v2491 = vadd.f32 %v2481, %v2487
  %v2492 = vadd.f32 %v2482, %v2487
  %v2493 = vmax.f32 %v2489, 0.0
  %v2494 = vmax.f32 %v2490, 0.0
  %v2495 = vmax.f32 %v2491, 0.0
  %v2496 = vmax.f32 %v2492, 0.0
  %2497 = vst [vmem:[#allocation2 + $0x8] sm:$0xff] %v2493
  %2498 = vst [vmem:[#allocation2 + $0x10] sm:$0xff] %v2494
  %2499 = vst [vmem:[#allocation2 + $0x18] sm:$0xff] %v2495
  %2500 = vst [vmem:[#allocation2 + $0x20] sm:$0xff] %v2496
  %v2501 = vld [vmem:[#allocation2 + $0x8] sm:$0xff]
  %v2502 = vld [vmem:[#allocation2 + $0x10] sm:$0xff]
  %v2503 = vld [vmem:[#allocation2 + $0x18] sm:$0xff]
  %v2504 = vld [vmem:[#allocation2 + $0x20] sm:$0xff]
  %v2505 = vld [vmem:[#allocation2 + $0x28] sm:$0xff]
  %2511 = vrot.lane.b32.xlu0 %v2501, 127
  %v2512 = vpop.permute.xlu0 %2511
  %2513 = vrot.lane.b32.xlu0 %v2502, 127
  %v2514 = vpop.permute.xlu0 %2513
  %2515 = vrot.lane.b32.xlu0 %v2503, 127
  %v2516 = vpop.permute.xlu0 %2515
  %2517 = vrot.lane.b32.xlu0 %v2504, 127
  %v2518 = vpop.permute.xlu0 %2517
  %2519 = vrot.lane.b32.xlu0 %v2505, 127
  %v2520 = vpop.permute.xlu0 %2519
  %v2521 = vsel %vm476, %v2512, %v2514
  %v2522 = vsel %vm476, %v2514, %v2516
  %v2523 = vsel %vm476, %v2516, %v2518
  %v2524 = vsel %vm476, %v2518, %v2520
  %v2529 = vmax.f32 %v2493, %v2521
  %v2530 = vmax.f32 %v2494, %v2522
  %v2531 = vmax.f32 %v2495, %v2523
  %v2532 = vmax.f32 %v2496, %v2524
  %2533 = vst [vmem:[#allocation2 + $0x8] sm:$0xff] %v2529
  %2534 = vst [vmem:[#allocation2 + $0x10] sm:$0xff] %v2530
  %2535 = vst [vmem:[#allocation2 + $0x18] sm:$0xff] %v2531
  %2536 = vst [vmem:[#allocation2 + $0x20] sm:$0xff] %v2532
  %v2537 = vld [vmem:[#allocation2 + $0x8] sm:$0xff]
  %v2538 = vld [vmem:[#allocation2 + $0x10] sm:$0xff]
  %v2539 = vld [vmem:[#allocation2 + $0x18] sm:$0xff]
  %v2540 = vld [vmem:[#allocation2 + $0x20] sm:$0xff]
  %v2541 = vld [vmem:[#allocation2 + $0x28] sm:$0xff]
  %2547 = vrot.lane.b32.xlu0 %v2537, 112
  %v2548 = vpop.permute.xlu0 %2547
  %2549 = vrot.lane.b32.xlu0 %v2538, 112
  %v2550 = vpop.permute.xlu0 %2549
  %2551 = vrot.lane.b32.xlu0 %v2539, 112
  %v2552 = vpop.permute.xlu0 %2551
  %2553 = vrot.lane.b32.xlu0 %v2540, 112
  %v2554 = vpop.permute.xlu0 %2553
  %2555 = vrot.lane.b32.xlu0 %v2541, 112
  %v2556 = vpop.permute.xlu0 %2555
  %v2557 = vsel %vm88, %v2548, %v2550
  %v2558 = vsel %vm88, %v2550, %v2552
  %v2559 = vsel %vm88, %v2552, %v2554
  %v2560 = vsel %vm88, %v2554, %v2556
  %v2565 = vmax.f32 %v2529, %v2557
  %v2566 = vmax.f32 %v2530, %v2558
  %v2567 = vmax.f32 %v2531, %v2559
  %v2568 = vmax.f32 %v2532, %v2560
  %v2569 = vld [vmem:[%s6] sm:$0xff]
  %v2570 = vld [vmem:[%s6 + $0x8] sm:$0xff]
  %v2571 = vld [vmem:[%s6 + $0x10] sm:$0xff]
  %v2572 = vld [vmem:[%s6 + $0x18] sm:$0xff]
  %v2573 = vld [vmem:[%s6 + $0x20] sm:$0xff]
  %v2574 = vld [vmem:[%s6 + $0x28] sm:$0xff]
  %v2575 = vld [vmem:[%s6 + $0x30] sm:$0xff]
  %v2576 = vld [vmem:[%s6 + $0x38] sm:$0xff]
  %v2577 = vld [vmem:[%s6 + $0x40] sm:$0xff]
  %v2578 = vld [vmem:[%s6 + $0x48] sm:$0xff]
  %v2579 = vld [vmem:[%s6 + $0x50] sm:$0xff]
  %v2580 = vld [vmem:[%s6 + $0x58] sm:$0xff]
  %v2581 = vld [vmem:[%s6 + $0x60] sm:$0xff]
  %v2582 = vld [vmem:[%s6 + $0x68] sm:$0xff]
  %v2583 = vld [vmem:[%s6 + $0x70] sm:$0xff]
  %v2584 = vld [vmem:[%s6 + $0x78] sm:$0xff]
  %v2585 = vld [vmem:[%s6 + $0x80] sm:$0xff]
  %v2586 = vld [vmem:[%s6 + $0x88] sm:$0xff]
  %v2587 = vld [vmem:[%s6 + $0x90] sm:$0xff]
  %v2588 = vld [vmem:[%s6 + $0x98] sm:$0xff]
  %v2589 = vld [vmem:[%s6 + $0xa0] sm:$0xff]
  %v2590 = vld [vmem:[%s6 + $0xa8] sm:$0xff]
  %v2591 = vld [vmem:[%s6 + $0xb0] sm:$0xff]
  %v2592 = vld [vmem:[%s6 + $0xb8] sm:$0xff]
  %v2593 = vld [vmem:[%s6 + $0xc0] sm:$0xff]
  %v2594 = vld [vmem:[%s6 + $0xc8] sm:$0xff]
  %v2595 = vld [vmem:[%s6 + $0xd0] sm:$0xff]
  %v2596 = vld [vmem:[%s6 + $0xd8] sm:$0xff]
  %v2597 = vld [vmem:[%s6 + $0xe0] sm:$0xff]
  %v2598 = vld [vmem:[%s6 + $0xe8] sm:$0xff]
  %v2599 = vld [vmem:[%s6 + $0xf0] sm:$0xff]
  %v2600 = vld [vmem:[%s6 + $0xf8] sm:$0xff]
  %v2601 = vld [vmem:[%s6 + $0x100] sm:$0xff]
  %v2602 = vld [vmem:[%s6 + $0x108] sm:$0xff]
  %v2603 = vld [vmem:[%s6 + $0x110] sm:$0xff]
  %v2604 = vld [vmem:[%s6 + $0x118] sm:$0xff]
  %v2605 = vld [vmem:[%s6 + $0x120] sm:$0xff]
  %v2606 = vld [vmem:[%s6 + $0x128] sm:$0xff]
  %v2607 = vld [vmem:[%s6 + $0x130] sm:$0xff]
  %v2608 = vld [vmem:[%s6 + $0x138] sm:$0xff]
  %v2609 = vld [vmem:[%s6 + $0x140] sm:$0xff]
  %v2610 = vld [vmem:[%s6 + $0x148] sm:$0xff]
  %v2611 = vld [vmem:[%s6 + $0x150] sm:$0xff]
  %v2612 = vld [vmem:[%s6 + $0x158] sm:$0xff]
  %v2613 = vld [vmem:[%s6 + $0x160] sm:$0xff]
  %v2614 = vld [vmem:[%s6 + $0x168] sm:$0xff]
  %v2615 = vld [vmem:[%s6 + $0x170] sm:$0xff]
  %v2616 = vld [vmem:[%s6 + $0x178] sm:$0xff]
  %v2617 = vld [vmem:[%s6 + $0x180] sm:$0xff]
  %v2618 = vld [vmem:[%s6 + $0x188] sm:$0xff]
  %v2619 = vld [vmem:[%s6 + $0x190] sm:$0xff]
  %v2620 = vld [vmem:[%s6 + $0x198] sm:$0xff]
  %v2621 = vld [vmem:[%s6 + $0x1a0] sm:$0xff]
  %v2622 = vld [vmem:[%s6 + $0x1a8] sm:$0xff]
  %v2623 = vld [vmem:[%s6 + $0x1b0] sm:$0xff]
  %v2624 = vld [vmem:[%s6 + $0x1b8] sm:$0xff]
  %v2625 = vld [vmem:[%s6 + $0x1c0] sm:$0xff]
  %v2626 = vld [vmem:[%s6 + $0x1c8] sm:$0xff]
  %v2627 = vld [vmem:[%s6 + $0x1d0] sm:$0xff]
  %v2628 = vld [vmem:[%s6 + $0x1d8] sm:$0xff]
  %v2629 = vld [vmem:[%s6 + $0x1e0] sm:$0xff]
  %v2630 = vld [vmem:[%s6 + $0x1e8] sm:$0xff]
  %v2631 = vld [vmem:[%s6 + $0x1f0] sm:$0xff]
  %v2632 = vld [vmem:[%s6 + $0x1f8] sm:$0xff]
  %2633 = vmatpush.msra.mxu0 %v2584
  %2634 = vmatpush.msra.mxu0 %v2583
  %2635 = vmatpush.msra.mxu0 %v2582
  %2636 = vmatpush.msra.mxu0 %v2581
  %2637 = vmatpush.msra.mxu0 %v2580
  %2638 = vmatpush.msra.mxu0 %v2579
  %2639 = vmatpush.msra.mxu0 %v2578
  %2640 = vmatpush.msra.mxu0 %v2577
  %2641 = vmatpush.msra.mxu0 %v2576
  %2642 = vmatpush.msra.mxu0 %v2575
  %2643 = vmatpush.msra.mxu0 %v2574
  %2644 = vmatpush.msra.mxu0 %v2573
  %2645 = vmatpush.msra.mxu0 %v2572
  %2646 = vmatpush.msra.mxu0 %v2571
  %2647 = vmatpush.msra.mxu0 %v2570
  %2648 = vmatpush.msra.mxu0 %v2569
  %2649 = vmatmul.f32.gmra.mxu0 %v2565
  %v2650 = vpop.f32.mrf.mxu0
  %v2651 = vadd.f32 0.0, %v2650
  %2652 = vdwg.mxu0
  %2653 = vmatpush.msra.mxu0 %v2600
  %2654 = vmatpush.msra.mxu0 %v2599
  %2655 = vmatpush.msra.mxu0 %v2598
  %2656 = vmatpush.msra.mxu0 %v2597
  %2657 = vmatpush.msra.mxu0 %v2596
  %2658 = vmatpush.msra.mxu0 %v2595
  %2659 = vmatpush.msra.mxu0 %v2594
  %2660 = vmatpush.msra.mxu0 %v2593
  %2661 = vmatpush.msra.mxu0 %v2592
  %2662 = vmatpush.msra.mxu0 %v2591
  %2663 = vmatpush.msra.mxu0 %v2590
  %2664 = vmatpush.msra.mxu0 %v2589
  %2665 = vmatpush.msra.mxu0 %v2588
  %2666 = vmatpush.msra.mxu0 %v2587
  %2667 = vmatpush.msra.mxu0 %v2586
  %2668 = vmatpush.msra.mxu0 %v2585
  %2669 = vmatmul.f32.gmra.mxu0 %v2566
  %v2670 = vpop.f32.mrf.mxu0
  %v2671 = vadd.f32 %v2651, %v2670
  %2672 = vdwg.mxu0
  %2673 = vmatpush.msra.mxu0 %v2616
  %2674 = vmatpush.msra.mxu0 %v2615
  %2675 = vmatpush.msra.mxu0 %v2614
  %2676 = vmatpush.msra.mxu0 %v2613
  %2677 = vmatpush.msra.mxu0 %v2612
  %2678 = vmatpush.msra.mxu0 %v2611
  %2679 = vmatpush.msra.mxu0 %v2610
  %2680 = vmatpush.msra.mxu0 %v2609
  %2681 = vmatpush.msra.mxu0 %v2608
  %2682 = vmatpush.msra.mxu0 %v2607
  %2683 = vmatpush.msra.mxu0 %v2606
  %2684 = vmatpush.msra.mxu0 %v2605
  %2685 = vmatpush.msra.mxu0 %v2604
  %2686 = vmatpush.msra.mxu0 %v2603
  %2687 = vmatpush.msra.mxu0 %v2602
  %2688 = vmatpush.msra.mxu0 %v2601
  %2689 = vmatmul.f32.gmra.mxu0 %v2567
  %v2690 = vpop.f32.mrf.mxu0
  %v2691 = vadd.f32 %v2671, %v2690
  %2692 = vdwg.mxu0
  %2693 = vmatpush.msra.mxu0 %v2632
  %2694 = vmatpush.msra.mxu0 %v2631
  %2695 = vmatpush.msra.mxu0 %v2630
  %2696 = vmatpush.msra.mxu0 %v2629
  %2697 = vmatpush.msra.mxu0 %v2628
  %2698 = vmatpush.msra.mxu0 %v2627
  %2699 = vmatpush.msra.mxu0 %v2626
  %2700 = vmatpush.msra.mxu0 %v2625
  %2701 = vmatpush.msra.mxu0 %v2624
  %2702 = vmatpush.msra.mxu0 %v2623
  %2703 = vmatpush.msra.mxu0 %v2622
  %2704 = vmatpush.msra.mxu0 %v2621
  %2705 = vmatpush.msra.mxu0 %v2620
  %2706 = vmatpush.msra.mxu0 %v2619
  %2707 = vmatpush.msra.mxu0 %v2618
  %2708 = vmatpush.msra.mxu0 %v2617
  %2709 = vmatmul.f32.gmra.mxu0 %v2568
  %v2710 = vpop.f32.mrf.mxu0
  %v2711 = vadd.f32 %v2691, %v2710
  %2712 = vdwg.mxu0
  %2713 = vst [vmem:[%s7] sm:$0xff] %v2711
  // Predicated region
  $region30: #{block_forward.1} parent=0 // pred_check
    _
  $region31: #{block_forward.1} parent=0 // pred_check_branch
    %2715 = sbr.rel (0) target = $region33
  $region32: #{block_forward.1} parent=0 // pred_region
    _
  $region33: #{block_forward.1} parent=0 // pred_fallthru
    _
  // Predicated region
  $region34: #{block_forward.1} parent=0 // pred_check
    _
  $region35: #{block_forward.1} parent=0 // pred_check_branch
    %2717 = sbr.rel (0) target = $region37
  $region36: #{block_forward.1} parent=0 // pred_region
    _
  $region37: #{block_forward.1} parent=0 // pred_fallthru
    _

</llo_original>
